<compile_context>
chip_gen: v5e
topology: v5e:2x2
jax: 0.10.0
libtpu: 0.0.40
codegen_flags: <defaults>
</compile_context>

<pallas_src>
import functools

import jax
import jax.numpy as jnp
from jax import lax
from jax.experimental import pallas as pl
from jax.experimental.pallas import tpu as pltpu

# ---------------- "config" (deterministic, small) ----------------
HIDDEN_SIZE = 32          # config.hidden_size
NUM_HEADS = 4             # config.num_attention_heads
HEAD_DIM = HIDDEN_SIZE // NUM_HEADS   # 8
MINI_BATCH_SIZE = 8       # config.mini_batch_size
CONV_KERNEL = 3           # config.conv_kernel
SHARE_QK = True           # config.share_qk (exercises the 2D depthwise-conv path)
USE_GATE = False          # config.use_gate
TTT_BASE_LR = 1.0         # config.ttt_base_lr


# ---------------- fused kernel ----------------
def _fused_qkv_kernel(x_ref, wqv_ref, sel_ref, eye_ref, wmq_ref, bq_ref, wmk_ref, bk_ref,
                      xq_ref, xk_ref, xv_ref, pad_ref,
                      *, N, D, nh, hd, H, W, K):
    f32 = jnp.float32
    R = nh * hd                       # stacked (head, channel) rows
    p = K // 2
    smax = p * W + p                  # max |flat tap shift| within a slab row
    gpr = N // hd                     # projection rows per slab row

    # ---- fused Q + V projection: one (N,D) x (D,2D) MXU matmul per batch ----
    x = x_ref[0]                                                   # (N, D)
    xqv = jnp.dot(x, wqv_ref[...], preferred_element_type=f32)     # (N, 2D)
    xq = xqv[:, :D]
    xv = xqv[:, D:]

    # ---- XV straight to the consumer layout [nh, N, hd] (pure lane slices) ----
    for h in range(nh):
        xv_ref[0, h] = xv[:, h * hd:(h + 1) * hd]

    # ---- assemble the depthwise-conv slabs (all heads stacked) into padded scratch ----
    # PyTorch: xq.view(B,N,nh,hd).transpose(1,2).reshape(B*nh, hd, H, W); flattened over
    # (H,W):  slab[h*hd+c, m] = xq[(c*N+m)//hd, h*hd + (c*N+m)%hd]
    # Zero-fill is REQUIRED: the folded weight*mask taps read the halo lanes and rely on
    # them being finite (0 * garbage would be fine, 0 * NaN would not).
    pad_ref[...] = jnp.zeros_like(pad_ref)
    for g in range(gpr):
        # sel_ref[g] is a precomputed 0/1 row-selection matrix -> xq rows g, gpr+g, ...
        gx = jnp.dot(sel_ref[g], xq, preferred_element_type=f32)   # (hd, D)
        for h in range(nh):
            pad_ref[h * hd:(h + 1) * hd, smax + g * hd: smax + (g + 1) * hd] = \
                gx[:, h * hd:(h + 1) * hd]

    # ---- depthwise KxK "same" conv for conv_q and conv_k in one shared tap loop ----
    # wm*_ref[t] already contains weight[r, t] * in_bounds_mask[t, m]  (built in wrapper),
    # so each tap is just a shifted slab slice times a precombined (R, N) coefficient.
    acc_q = jnp.zeros((R, N), f32)
    acc_k = jnp.zeros((R, N), f32)
    t = 0
    for di in range(-p, p + 1):
        for dj in range(-p, p + 1):
            s = di * W + dj
            tap = pad_ref[:, smax + s: smax + s + N]               # slab shifted by s
            acc_q = acc_q + wmq_ref[t] * tap
            acc_k = acc_k + wmk_ref[t] * tap
            t += 1
    acc_q = acc_q + bq_ref[...]
    acc_k = acc_k + bk_ref[...]

    # ---- (R,N) -> (N,R) transpose via the MXU (I_N contracted on acc's lane axis) ----
    eye_n = eye_ref[...]                                           # (N, N) identity
    dn = (((1,), (1,)), ((), ()))                                  # A @ B.T form
    xq_t = lax.dot_general(eye_n, acc_q, dn, preferred_element_type=f32)   # (N, R)
    xk_t = lax.dot_general(eye_n, acc_k, dn, preferred_element_type=f32)   # (N, R)
    for h in range(nh):
        xq_ref[0, h] = xq_t[:, h * hd:(h + 1) * hd]
        xk_ref[0, h] = xk_t[:, h * hd:(h + 1) * hd]


# ---------------- forward ----------------
def ttt_base_2d_forward(hidden_states, params):
    B, N, D = hidden_states.shape
    H = W = int(N ** 0.5)
    nh, hd, mbs, K = NUM_HEADS, HEAD_DIM, MINI_BATCH_SIZE, CONV_KERNEL
    assert H * W == N and D == nh * hd
    assert N % hd == 0 and N % mbs == 0
    num_mb = N // mbs
    R, KK = nh * hd, K * K
    p = K // 2
    smax = p * W + p
    gpr = N // hd

    # --- tiny per-call parameter prep (runs once in XLA, outside the kernel) ---
    # fused Q|V projection weight
    wqv_t = jnp.concatenate([params["wq_t"], params["wv_t"]], axis=1)        # (D, 2D)
    # depthwise taps tiled over heads
    wq_tap = jnp.tile(params["conv_q_w"].reshape(hd, KK), (nh, 1))           # (R, K*K)
    wk_tap = jnp.tile(params["conv_k_w"].reshape(hd, KK), (nh, 1))
    bq = jnp.tile(params["conv_q_b"].reshape(hd, 1), (nh, 1))                # (R, 1)
    bk = jnp.tile(params["conv_k_b"].reshape(hd, 1), (nh, 1))

    # --- compile-time constants for the kernel (XLA folds these) ---
    # row-selection matrices for the slab assembly: sel[g] @ xq == xq rows g, gpr+g, ...
    r_idx = jnp.arange(hd)[:, None]
    c_idx = jnp.arange(N)[None, :]
    sel = jnp.stack([(c_idx == r_idx * gpr + g).astype(jnp.float32)
                     for g in range(gpr)])                                   # (gpr, hd, N)
    eye_n = jnp.eye(N, dtype=jnp.float32)                                    # (N, N)
    # per-tap "same"-padding in-bounds mask over the flattened spatial axis
    m_flat = jnp.arange(N)
    mi, mj = m_flat // W, m_flat % W
    mask = jnp.stack([((mi + di >= 0) & (mi + di < H) &
                       (mj + dj >= 0) & (mj + dj < W)).astype(jnp.float32)
                      for di in range(-p, p + 1) for dj in range(-p, p + 1)])  # (KK, N)
    # fold the mask into the tap weights: wm[t, r, m] = w[r, t] * mask[t, m]
    wmq = wq_tap.T[:, :, None] * mask[:, None, :]                            # (KK, R, N)
    wmk = wk_tap.T[:, :, None] * mask[:, None, :]                            # (KK, R, N)

    kern = functools.partial(_fused_qkv_kernel, N=N, D=D, nh=nh, hd=hd, H=H, W=W, K=K)
    out_shape = tuple(jax.ShapeDtypeStruct((B, nh, N, hd), jnp.float32) for _ in range(3))
    XQ, XK, XV = pl.pallas_call(
        kern,
        out_shape=out_shape,
        grid=(B,),
        in_specs=[
            pl.BlockSpec((1, N, D), lambda b: (b, 0, 0)),        # hidden_states
            pl.BlockSpec((D, 2 * D), lambda b: (0, 0)),          # W_q | W_v
            pl.BlockSpec((gpr, hd, N), lambda b: (0, 0, 0)),     # selection matrices
            pl.BlockSpec((N, N), lambda b: (0, 0)),              # identity (transpose)
            pl.BlockSpec((KK, R, N), lambda b: (0, 0, 0)),       # conv_q taps * mask
            pl.BlockSpec((R, 1), lambda b: (0, 0)),              # conv_q bias
            pl.BlockSpec((KK, R, N), lambda b: (0, 0, 0)),       # conv_k taps * mask
            pl.BlockSpec((R, 1), lambda b: (0, 0)),              # conv_k bias
        ],
        out_specs=tuple(pl.BlockSpec((1, nh, N, hd), lambda b: (b, 0, 0, 0))
                        for _ in range(3)),
        scratch_shapes=[pltpu.VMEM((R, N + 2 * smax), jnp.float32)],
        compiler_params=pltpu.CompilerParams(dimension_semantics=("parallel",)),
    )(hidden_states, wqv_t, sel, eye_n, wmq, bq, wmk, bk)

    # get_ttt_inputs: mini-batch regrouping is a pure leading-dim reshape (no relayout)
    XQ = XQ.reshape(B, nh, num_mb, mbs, hd)
    XK = XK.reshape(B, nh, num_mb, mbs, hd)
    XV = XV.reshape(B, nh, num_mb, mbs, hd)

    # get_eta: tiny constant-shaped math, plain jnp (a pallas dispatch would cost more)
    tok = params["token_idx"][:mbs].astype(jnp.float32).reshape(mbs, 1)
    tril = jnp.tril(jnp.broadcast_to(tok, (mbs, mbs)))        # [i,j] = tok[i] if j<=i else 0
    token_eta = jnp.broadcast_to(tril[None, None], (B, nh, mbs, mbs))
    ttt_lr_eta = jnp.full((B, nh, mbs, mbs), TTT_BASE_LR, dtype=hidden_states.dtype)
    eta = jnp.broadcast_to((tril * TTT_BASE_LR)[None, None, None],
                           (B, nh, num_mb, mbs, mbs))

    # TODO(synk): TTTBase2D.ttt() is abstract in the reference module, so the inner-loop
    # update and the o_proj / post_norm / g_proj that consume its output cannot be
    # reproduced; the fully-formed ttt inputs are returned instead.
    return {"XQ": XQ, "XK": XK, "XV": XV, "eta": eta,
            "token_eta": token_eta, "ttt_lr_eta": ttt_lr_eta}


# ---------------- main ----------------
if __name__ == "__main__":
    key = jax.random.PRNGKey(0)
    ks = jax.random.split(key, 8)
    D, nh, hd = HIDDEN_SIZE, NUM_HEADS, HEAD_DIM

    params = {
        # nn.Linear weights stored pre-transposed as (in, out): y = x @ W^T
        "wq_t": 0.05 * jax.random.normal(ks[0], (D, nh * hd), jnp.float32),
        "wv_t": 0.05 * jax.random.normal(ks[1], (D, nh * hd), jnp.float32),
        # depthwise Conv2d(head_dim, head_dim, k, groups=head_dim): weight (C,1,k,k)->(C,k,k)
        "conv_q_w": 0.1 * jax.random.normal(ks[2], (hd, CONV_KERNEL, CONV_KERNEL), jnp.float32),
        "conv_q_b": 0.1 * jax.random.normal(ks[3], (hd,), jnp.float32),
        "conv_k_w": 0.1 * jax.random.normal(ks[4], (hd, CONV_KERNEL, CONV_KERNEL), jnp.float32),
        "conv_k_b": 0.1 * jax.random.normal(ks[5], (hd,), jnp.float32),
        # registered buffer
        "token_idx": 1.0 / jnp.arange(1, MINI_BATCH_SIZE + 1, dtype=jnp.float32),
        # parameters created in __init__ but unused by the concrete (abstract-ttt) forward:
        "learnable_token_idx": jnp.zeros((MINI_BATCH_SIZE,), jnp.float32),
        "ttt_norm_weight": jnp.ones((nh, hd), jnp.float32),
        "ttt_norm_bias": jnp.zeros((nh, hd), jnp.float32),
        "o_proj_w_t": 0.05 * jax.random.normal(ks[6], (nh * hd, D), jnp.float32),
        "post_norm_w": jnp.ones((D,), jnp.float32),
        "post_norm_b": jnp.zeros((D,), jnp.float32),
    }

    B, N = 2, 16          # N = H*W with H = W = 4
    x = jax.random.normal(ks[7], (B, N, D), dtype=jnp.float32)

    out = jax.jit(ttt_base_2d_forward)(x, params)
    jax.block_until_ready(out)
    print("KERNEL_OK")
</pallas_src>

<mosaic_0001>
module attributes {stable_mosaic.version = 11 : i64} {
  func.func @_fused_qkv_kernel(%arg0: i32, %arg1: memref<1x16x32xf32, #tpu.memory_space<vmem>>, %arg2: memref<32x64xf32, #tpu.memory_space<vmem>>, %arg3: memref<2x8x16xf32, #tpu.memory_space<vmem>>, %arg4: memref<16x16xf32, #tpu.memory_space<vmem>>, %arg5: memref<9x32x16xf32, #tpu.memory_space<vmem>>, %arg6: memref<32x1xf32, #tpu.memory_space<vmem>>, %arg7: memref<9x32x16xf32, #tpu.memory_space<vmem>>, %arg8: memref<32x1xf32, #tpu.memory_space<vmem>>, %arg9: memref<1x4x16x8xf32, #tpu.memory_space<vmem>>, %arg10: memref<1x4x16x8xf32, #tpu.memory_space<vmem>>, %arg11: memref<1x4x16x8xf32, #tpu.memory_space<vmem>>, %arg12: memref<32x26xf32, #tpu.memory_space<vmem>>) attributes {dimension_semantics = [#tpu.dimension_semantics<parallel>], iteration_bounds = array<i64: 2>, scalar_prefetch = 0 : i64, scratch_operands = 1 : i64, tpu.core_type = #tpu.core_type<tc>, window_params = [{transform_indices = @transform_0, window_bounds = array<i64: 1, 16, 32>}, {pipeline_mode = #tpu.pipeline_mode<synchronous>, transform_indices = @transform_1, window_bounds = array<i64: 32, 64>}, {pipeline_mode = #tpu.pipeline_mode<synchronous>, transform_indices = @transform_2, window_bounds = array<i64: 2, 8, 16>}, {pipeline_mode = #tpu.pipeline_mode<synchronous>, transform_indices = @transform_3, window_bounds = array<i64: 16, 16>}, {pipeline_mode = #tpu.pipeline_mode<synchronous>, transform_indices = @transform_4, window_bounds = array<i64: 9, 32, 16>}, {pipeline_mode = #tpu.pipeline_mode<synchronous>, transform_indices = @transform_5, window_bounds = array<i64: 32, 1>}, {pipeline_mode = #tpu.pipeline_mode<synchronous>, transform_indices = @transform_6, window_bounds = array<i64: 9, 32, 16>}, {pipeline_mode = #tpu.pipeline_mode<synchronous>, transform_indices = @transform_7, window_bounds = array<i64: 32, 1>}, {transform_indices = @transform_8, window_bounds = array<i64: 1, 4, 16, 8>}, {transform_indices = @transform_9, window_bounds = array<i64: 1, 4, 16, 8>}, {transform_indices = @transform_10, window_bounds = array<i64: 1, 4, 16, 8>}]} {
    %c0 = arith.constant 0 : index
    %c0_0 = arith.constant 0 : index
    %c0_1 = arith.constant 0 : index
    %0 = vector.load %arg1[%c0, %c0_0, %c0_1] : memref<1x16x32xf32, #tpu.memory_space<vmem>>, vector<1x16x32xf32>
    %1 = vector.shape_cast %0 : vector<1x16x32xf32> to vector<16x32xf32>
    %c0_2 = arith.constant 0 : index
    %c0_3 = arith.constant 0 : index
    %2 = vector.load %arg2[%c0_2, %c0_3] : memref<32x64xf32, #tpu.memory_space<vmem>>, vector<32x64xf32>
    %cst = arith.constant dense<0.000000e+00> : vector<16x64xf32>
    %3 = tpu.matmul %1, %2, %cst {dimension_numbers = #tpu.dot_dimension_numbers<[1], [0], [0], [1], [0, 0, 1, 1], [], []>} : vector<16x32xf32>, vector<32x64xf32>, vector<16x64xf32> -> vector<16x64xf32>
    %4 = vector.extract_strided_slice %3 {offsets = [0, 0], sizes = [16, 32], strides = [1, 1]} : vector<16x64xf32> to vector<16x32xf32>
    %5 = vector.extract_strided_slice %3 {offsets = [0, 32], sizes = [16, 32], strides = [1, 1]} : vector<16x64xf32> to vector<16x32xf32>
    %6 = vector.extract_strided_slice %5 {offsets = [0, 0], sizes = [16, 8], strides = [1, 1]} : vector<16x32xf32> to vector<16x8xf32>
    %c0_4 = arith.constant 0 : index
    %c0_5 = arith.constant 0 : index
    %c0_6 = arith.constant 0 : index
    %c0_7 = arith.constant 0 : index
    %7 = vector.load %arg11[%c0_4, %c0_5, %c0_6, %c0_7] : memref<1x4x16x8xf32, #tpu.memory_space<vmem>>, vector<1x1x16x8xf32>
    %8 = vector.shape_cast %7 : vector<1x1x16x8xf32> to vector<16x8xf32>
    %9 = vector.shape_cast %6 : vector<16x8xf32> to vector<1x1x16x8xf32>
    tpu.vector_store %arg11[%c0_4, %c0_5, %c0_6, %c0_7], %9 {strides = array<i32>} : memref<1x4x16x8xf32, #tpu.memory_space<vmem>>, vector<1x1x16x8xf32>,
    %10 = vector.extract_strided_slice %5 {offsets = [0, 8], sizes = [16, 8], strides = [1, 1]} : vector<16x32xf32> to vector<16x8xf32>
    %c0_8 = arith.constant 0 : index
    %c1 = arith.constant 1 : index
    %c0_9 = arith.constant 0 : index
    %c0_10 = arith.constant 0 : index
    %11 = vector.load %arg11[%c0_8, %c1, %c0_9, %c0_10] : memref<1x4x16x8xf32, #tpu.memory_space<vmem>>, vector<1x1x16x8xf32>
    %12 = vector.shape_cast %11 : vector<1x1x16x8xf32> to vector<16x8xf32>
    %13 = vector.shape_cast %10 : vector<16x8xf32> to vector<1x1x16x8xf32>
    tpu.vector_store %arg11[%c0_8, %c1, %c0_9, %c0_10], %13 {strides = array<i32>} : memref<1x4x16x8xf32, #tpu.memory_space<vmem>>, vector<1x1x16x8xf32>,
    %14 = vector.extract_strided_slice %5 {offsets = [0, 16], sizes = [16, 8], strides = [1, 1]} : vector<16x32xf32> to vector<16x8xf32>
    %c0_11 = arith.constant 0 : index
    %c2 = arith.constant 2 : index
    %c0_12 = arith.constant 0 : index
    %c0_13 = arith.constant 0 : index
    %15 = vector.load %arg11[%c0_11, %c2, %c0_12, %c0_13] : memref<1x4x16x8xf32, #tpu.memory_space<vmem>>, vector<1x1x16x8xf32>
    %16 = vector.shape_cast %15 : vector<1x1x16x8xf32> to vector<16x8xf32>
    %17 = vector.shape_cast %14 : vector<16x8xf32> to vector<1x1x16x8xf32>
    tpu.vector_store %arg11[%c0_11, %c2, %c0_12, %c0_13], %17 {strides = array<i32>} : memref<1x4x16x8xf32, #tpu.memory_space<vmem>>, vector<1x1x16x8xf32>,
    %18 = vector.extract_strided_slice %5 {offsets = [0, 24], sizes = [16, 8], strides = [1, 1]} : vector<16x32xf32> to vector<16x8xf32>
    %c0_14 = arith.constant 0 : index
    %c3 = arith.constant 3 : index
    %c0_15 = arith.constant 0 : index
    %c0_16 = arith.constant 0 : index
    %19 = vector.load %arg11[%c0_14, %c3, %c0_15, %c0_16] : memref<1x4x16x8xf32, #tpu.memory_space<vmem>>, vector<1x1x16x8xf32>
    %20 = vector.shape_cast %19 : vector<1x1x16x8xf32> to vector<16x8xf32>
    %21 = vector.shape_cast %18 : vector<16x8xf32> to vector<1x1x16x8xf32>
    tpu.vector_store %arg11[%c0_14, %c3, %c0_15, %c0_16], %21 {strides = array<i32>} : memref<1x4x16x8xf32, #tpu.memory_space<vmem>>, vector<1x1x16x8xf32>,
    %cst_17 = arith.constant 0.000000e+00 : f32
    %22 = vector.broadcast %cst_17 : f32 to vector<32x26xf32>
    %c0_18 = arith.constant 0 : index
    %c0_19 = arith.constant 0 : index
    %23 = vector.load %arg12[%c0_18, %c0_19] : memref<32x26xf32, #tpu.memory_space<vmem>>, vector<32x26xf32>
    tpu.vector_store %arg12[%c0_18, %c0_19], %22 {strides = array<i32>} : memref<32x26xf32, #tpu.memory_space<vmem>>, vector<32x26xf32>,
    %c0_20 = arith.constant 0 : index
    %c0_21 = arith.constant 0 : index
    %c0_22 = arith.constant 0 : index
    %24 = vector.load %arg3[%c0_20, %c0_21, %c0_22] : memref<2x8x16xf32, #tpu.memory_space<vmem>>, vector<1x8x16xf32>
    %25 = vector.shape_cast %24 : vector<1x8x16xf32> to vector<8x16xf32>
    %cst_23 = arith.constant dense<0.000000e+00> : vector<8x32xf32>
    %26 = tpu.matmul %25, %4, %cst_23 {dimension_numbers = #tpu.dot_dimension_numbers<[1], [0], [0], [1], [0, 0, 1, 1], [], []>} : vector<8x16xf32>, vector<16x32xf32>, vector<8x32xf32> -> vector<8x32xf32>
    %27 = vector.extract_strided_slice %26 {offsets = [0, 0], sizes = [8, 8], strides = [1, 1]} : vector<8x32xf32> to vector<8x8xf32>
    %c0_24 = arith.constant 0 : index
    %c5 = arith.constant 5 : index
    %28 = vector.load %arg12[%c0_24, %c5] : memref<32x26xf32, #tpu.memory_space<vmem>>, vector<8x8xf32>
    tpu.vector_store %arg12[%c0_24, %c5], %27 {strides = array<i32>} : memref<32x26xf32, #tpu.memory_space<vmem>>, vector<8x8xf32>,
    %29 = vector.extract_strided_slice %26 {offsets = [0, 8], sizes = [8, 8], strides = [1, 1]} : vector<8x32xf32> to vector<8x8xf32>
    %c8 = arith.constant 8 : index
    %c5_25 = arith.constant 5 : index
    %30 = vector.load %arg12[%c8, %c5_25] : memref<32x26xf32, #tpu.memory_space<vmem>>, vector<8x8xf32>
    tpu.vector_store %arg12[%c8, %c5_25], %29 {strides = array<i32>} : memref<32x26xf32, #tpu.memory_space<vmem>>, vector<8x8xf32>,
    %31 = vector.extract_strided_slice %26 {offsets = [0, 16], sizes = [8, 8], strides = [1, 1]} : vector<8x32xf32> to vector<8x8xf32>
    %c16 = arith.constant 16 : index
    %c5_26 = arith.constant 5 : index
    %32 = vector.load %arg12[%c16, %c5_26] : memref<32x26xf32, #tpu.memory_space<vmem>>, vector<8x8xf32>
    tpu.vector_store %arg12[%c16, %c5_26], %31 {strides = array<i32>} : memref<32x26xf32, #tpu.memory_space<vmem>>, vector<8x8xf32>,
    %33 = vector.extract_strided_slice %26 {offsets = [0, 24], sizes = [8, 8], strides = [1, 1]} : vector<8x32xf32> to vector<8x8xf32>
    %c24 = arith.constant 24 : index
    %c5_27 = arith.constant 5 : index
    %34 = vector.load %arg12[%c24, %c5_27] : memref<32x26xf32, #tpu.memory_space<vmem>>, vector<8x8xf32>
    tpu.vector_store %arg12[%c24, %c5_27], %33 {strides = array<i32>} : memref<32x26xf32, #tpu.memory_space<vmem>>, vector<8x8xf32>,
    %c1_28 = arith.constant 1 : index
    %c0_29 = arith.constant 0 : index
    %c0_30 = arith.constant 0 : index
    %35 = vector.load %arg3[%c1_28, %c0_29, %c0_30] : memref<2x8x16xf32, #tpu.memory_space<vmem>>, vector<1x8x16xf32>
    %36 = vector.shape_cast %35 : vector<1x8x16xf32> to vector<8x16xf32>
    %cst_31 = arith.constant dense<0.000000e+00> : vector<8x32xf32>
    %37 = tpu.matmul %36, %4, %cst_31 {dimension_numbers = #tpu.dot_dimension_numbers<[1], [0], [0], [1], [0, 0, 1, 1], [], []>} : vector<8x16xf32>, vector<16x32xf32>, vector<8x32xf32> -> vector<8x32xf32>
    %38 = vector.extract_strided_slice %37 {offsets = [0, 0], sizes = [8, 8], strides = [1, 1]} : vector<8x32xf32> to vector<8x8xf32>
    %c0_32 = arith.constant 0 : index
    %c13 = arith.constant 13 : index
    %39 = vector.load %arg12[%c0_32, %c13] : memref<32x26xf32, #tpu.memory_space<vmem>>, vector<8x8xf32>
    tpu.vector_store %arg12[%c0_32, %c13], %38 {strides = array<i32>} : memref<32x26xf32, #tpu.memory_space<vmem>>, vector<8x8xf32>,
    %40 = vector.extract_strided_slice %37 {offsets = [0, 8], sizes = [8, 8], strides = [1, 1]} : vector<8x32xf32> to vector<8x8xf32>
    %c8_33 = arith.constant 8 : index
    %c13_34 = arith.constant 13 : index
    %41 = vector.load %arg12[%c8_33, %c13_34] : memref<32x26xf32, #tpu.memory_space<vmem>>, vector<8x8xf32>
    tpu.vector_store %arg12[%c8_33, %c13_34], %40 {strides = array<i32>} : memref<32x26xf32, #tpu.memory_space<vmem>>, vector<8x8xf32>,
    %42 = vector.extract_strided_slice %37 {offsets = [0, 16], sizes = [8, 8], strides = [1, 1]} : vector<8x32xf32> to vector<8x8xf32>
    %c16_35 = arith.constant 16 : index
    %c13_36 = arith.constant 13 : index
    %43 = vector.load %arg12[%c16_35, %c13_36] : memref<32x26xf32, #tpu.memory_space<vmem>>, vector<8x8xf32>
    tpu.vector_store %arg12[%c16_35, %c13_36], %42 {strides = array<i32>} : memref<32x26xf32, #tpu.memory_space<vmem>>, vector<8x8xf32>,
    %44 = vector.extract_strided_slice %37 {offsets = [0, 24], sizes = [8, 8], strides = [1, 1]} : vector<8x32xf32> to vector<8x8xf32>
    %c24_37 = arith.constant 24 : index
    %c13_38 = arith.constant 13 : index
    %45 = vector.load %arg12[%c24_37, %c13_38] : memref<32x26xf32, #tpu.memory_space<vmem>>, vector<8x8xf32>
    tpu.vector_store %arg12[%c24_37, %c13_38], %44 {strides = array<i32>} : memref<32x26xf32, #tpu.memory_space<vmem>>, vector<8x8xf32>,
    %cst_39 = arith.constant 0.000000e+00 : f32
    %46 = vector.broadcast %cst_39 : f32 to vector<32x16xf32>
    %cst_40 = arith.constant 0.000000e+00 : f32
    %47 = vector.broadcast %cst_40 : f32 to vector<32x16xf32>
    %c0_41 = arith.constant 0 : index
    %c0_42 = arith.constant 0 : index
    %48 = vector.load %arg12[%c0_41, %c0_42] : memref<32x26xf32, #tpu.memory_space<vmem>>, vector<32x16xf32>
    %c0_43 = arith.constant 0 : index
    %c0_44 = arith.constant 0 : index
    %c0_45 = arith.constant 0 : index
    %49 = vector.load %arg5[%c0_43, %c0_44, %c0_45] : memref<9x32x16xf32, #tpu.memory_space<vmem>>, vector<1x32x16xf32>
    %50 = vector.shape_cast %49 : vector<1x32x16xf32> to vector<32x16xf32>
    %51 = arith.mulf %50, %48 : vector<32x16xf32>
    %52 = arith.addf %46, %51 : vector<32x16xf32>
    %c0_46 = arith.constant 0 : index
    %c0_47 = arith.constant 0 : index
    %c0_48 = arith.constant 0 : index
    %53 = vector.load %arg7[%c0_46, %c0_47, %c0_48] : memref<9x32x16xf32, #tpu.memory_space<vmem>>, vector<1x32x16xf32>
    %54 = vector.shape_cast %53 : vector<1x32x16xf32> to vector<32x16xf32>
    %55 = arith.mulf %54, %48 : vector<32x16xf32>
    %56 = arith.addf %47, %55 : vector<32x16xf32>
    %c0_49 = arith.constant 0 : index
    %c1_50 = arith.constant 1 : index
    %57 = vector.load %arg12[%c0_49, %c1_50] : memref<32x26xf32, #tpu.memory_space<vmem>>, vector<32x16xf32>
    %c1_51 = arith.constant 1 : index
    %c0_52 = arith.constant 0 : index
    %c0_53 = arith.constant 0 : index
    %58 = vector.load %arg5[%c1_51, %c0_52, %c0_53] : memref<9x32x16xf32, #tpu.memory_space<vmem>>, vector<1x32x16xf32>
    %59 = vector.shape_cast %58 : vector<1x32x16xf32> to vector<32x16xf32>
    %60 = arith.mulf %59, %57 : vector<32x16xf32>
    %61 = arith.addf %52, %60 : vector<32x16xf32>
    %c1_54 = arith.constant 1 : index
    %c0_55 = arith.constant 0 : index
    %c0_56 = arith.constant 0 : index
    %62 = vector.load %arg7[%c1_54, %c0_55, %c0_56] : memref<9x32x16xf32, #tpu.memory_space<vmem>>, vector<1x32x16xf32>
    %63 = vector.shape_cast %62 : vector<1x32x16xf32> to vector<32x16xf32>
    %64 = arith.mulf %63, %57 : vector<32x16xf32>
    %65 = arith.addf %56, %64 : vector<32x16xf32>
    %c0_57 = arith.constant 0 : index
    %c2_58 = arith.constant 2 : index
    %66 = vector.load %arg12[%c0_57, %c2_58] : memref<32x26xf32, #tpu.memory_space<vmem>>, vector<32x16xf32>
    %c2_59 = arith.constant 2 : index
    %c0_60 = arith.constant 0 : index
    %c0_61 = arith.constant 0 : index
    %67 = vector.load %arg5[%c2_59, %c0_60, %c0_61] : memref<9x32x16xf32, #tpu.memory_space<vmem>>, vector<1x32x16xf32>
    %68 = vector.shape_cast %67 : vector<1x32x16xf32> to vector<32x16xf32>
    %69 = arith.mulf %68, %66 : vector<32x16xf32>
    %70 = arith.addf %61, %69 : vector<32x16xf32>
    %c2_62 = arith.constant 2 : index
    %c0_63 = arith.constant 0 : index
    %c0_64 = arith.constant 0 : index
    %71 = vector.load %arg7[%c2_62, %c0_63, %c0_64] : memref<9x32x16xf32, #tpu.memory_space<vmem>>, vector<1x32x16xf32>
    %72 = vector.shape_cast %71 : vector<1x32x16xf32> to vector<32x16xf32>
    %73 = arith.mulf %72, %66 : vector<32x16xf32>
    %74 = arith.addf %65, %73 : vector<32x16xf32>
    %c0_65 = arith.constant 0 : index
    %c4 = arith.constant 4 : index
    %75 = vector.load %arg12[%c0_65, %c4] : memref<32x26xf32, #tpu.memory_space<vmem>>, vector<32x16xf32>
    %c3_66 = arith.constant 3 : index
    %c0_67 = arith.constant 0 : index
    %c0_68 = arith.constant 0 : index
    %76 = vector.load %arg5[%c3_66, %c0_67, %c0_68] : memref<9x32x16xf32, #tpu.memory_space<vmem>>, vector<1x32x16xf32>
    %77 = vector.shape_cast %76 : vector<1x32x16xf32> to vector<32x16xf32>
    %78 = arith.mulf %77, %75 : vector<32x16xf32>
    %79 = arith.addf %70, %78 : vector<32x16xf32>
    %c3_69 = arith.constant 3 : index
    %c0_70 = arith.constant 0 : index
    %c0_71 = arith.constant 0 : index
    %80 = vector.load %arg7[%c3_69, %c0_70, %c0_71] : memref<9x32x16xf32, #tpu.memory_space<vmem>>, vector<1x32x16xf32>
    %81 = vector.shape_cast %80 : vector<1x32x16xf32> to vector<32x16xf32>
    %82 = arith.mulf %81, %75 : vector<32x16xf32>
    %83 = arith.addf %74, %82 : vector<32x16xf32>
    %c0_72 = arith.constant 0 : index
    %c5_73 = arith.constant 5 : index
    %84 = vector.load %arg12[%c0_72, %c5_73] : memref<32x26xf32, #tpu.memory_space<vmem>>, vector<32x16xf32>
    %c4_74 = arith.constant 4 : index
    %c0_75 = arith.constant 0 : index
    %c0_76 = arith.constant 0 : index
    %85 = vector.load %arg5[%c4_74, %c0_75, %c0_76] : memref<9x32x16xf32, #tpu.memory_space<vmem>>, vector<1x32x16xf32>
    %86 = vector.shape_cast %85 : vector<1x32x16xf32> to vector<32x16xf32>
    %87 = arith.mulf %86, %84 : vector<32x16xf32>
    %88 = arith.addf %79, %87 : vector<32x16xf32>
    %c4_77 = arith.constant 4 : index
    %c0_78 = arith.constant 0 : index
    %c0_79 = arith.constant 0 : index
    %89 = vector.load %arg7[%c4_77, %c0_78, %c0_79] : memref<9x32x16xf32, #tpu.memory_space<vmem>>, vector<1x32x16xf32>
    %90 = vector.shape_cast %89 : vector<1x32x16xf32> to vector<32x16xf32>
    %91 = arith.mulf %90, %84 : vector<32x16xf32>
    %92 = arith.addf %83, %91 : vector<32x16xf32>
    %c0_80 = arith.constant 0 : index
    %c6 = arith.constant 6 : index
    %93 = vector.load %arg12[%c0_80, %c6] : memref<32x26xf32, #tpu.memory_space<vmem>>, vector<32x16xf32>
    %c5_81 = arith.constant 5 : index
    %c0_82 = arith.constant 0 : index
    %c0_83 = arith.constant 0 : index
    %94 = vector.load %arg5[%c5_81, %c0_82, %c0_83] : memref<9x32x16xf32, #tpu.memory_space<vmem>>, vector<1x32x16xf32>
    %95 = vector.shape_cast %94 : vector<1x32x16xf32> to vector<32x16xf32>
    %96 = arith.mulf %95, %93 : vector<32x16xf32>
    %97 = arith.addf %88, %96 : vector<32x16xf32>
    %c5_84 = arith.constant 5 : index
    %c0_85 = arith.constant 0 : index
    %c0_86 = arith.constant 0 : index
    %98 = vector.load %arg7[%c5_84, %c0_85, %c0_86] : memref<9x32x16xf32, #tpu.memory_space<vmem>>, vector<1x32x16xf32>
    %99 = vector.shape_cast %98 : vector<1x32x16xf32> to vector<32x16xf32>
    %100 = arith.mulf %99, %93 : vector<32x16xf32>
    %101 = arith.addf %92, %100 : vector<32x16xf32>
    %c0_87 = arith.constant 0 : index
    %c8_88 = arith.constant 8 : index
    %102 = vector.load %arg12[%c0_87, %c8_88] : memref<32x26xf32, #tpu.memory_space<vmem>>, vector<32x16xf32>
    %c6_89 = arith.constant 6 : index
    %c0_90 = arith.constant 0 : index
    %c0_91 = arith.constant 0 : index
    %103 = vector.load %arg5[%c6_89, %c0_90, %c0_91] : memref<9x32x16xf32, #tpu.memory_space<vmem>>, vector<1x32x16xf32>
    %104 = vector.shape_cast %103 : vector<1x32x16xf32> to vector<32x16xf32>
    %105 = arith.mulf %104, %102 : vector<32x16xf32>
    %106 = arith.addf %97, %105 : vector<32x16xf32>
    %c6_92 = arith.constant 6 : index
    %c0_93 = arith.constant 0 : index
    %c0_94 = arith.constant 0 : index
    %107 = vector.load %arg7[%c6_92, %c0_93, %c0_94] : memref<9x32x16xf32, #tpu.memory_space<vmem>>, vector<1x32x16xf32>
    %108 = vector.shape_cast %107 : vector<1x32x16xf32> to vector<32x16xf32>
    %109 = arith.mulf %108, %102 : vector<32x16xf32>
    %110 = arith.addf %101, %109 : vector<32x16xf32>
    %c0_95 = arith.constant 0 : index
    %c9 = arith.constant 9 : index
    %111 = vector.load %arg12[%c0_95, %c9] : memref<32x26xf32, #tpu.memory_space<vmem>>, vector<32x16xf32>
    %c7 = arith.constant 7 : index
    %c0_96 = arith.constant 0 : index
    %c0_97 = arith.constant 0 : index
    %112 = vector.load %arg5[%c7, %c0_96, %c0_97] : memref<9x32x16xf32, #tpu.memory_space<vmem>>, vector<1x32x16xf32>
    %113 = vector.shape_cast %112 : vector<1x32x16xf32> to vector<32x16xf32>
    %114 = arith.mulf %113, %111 : vector<32x16xf32>
    %115 = arith.addf %106, %114 : vector<32x16xf32>
    %c7_98 = arith.constant 7 : index
    %c0_99 = arith.constant 0 : index
    %c0_100 = arith.constant 0 : index
    %116 = vector.load %arg7[%c7_98, %c0_99, %c0_100] : memref<9x32x16xf32, #tpu.memory_space<vmem>>, vector<1x32x16xf32>
    %117 = vector.shape_cast %116 : vector<1x32x16xf32> to vector<32x16xf32>
    %118 = arith.mulf %117, %111 : vector<32x16xf32>
    %119 = arith.addf %110, %118 : vector<32x16xf32>
    %c0_101 = arith.constant 0 : index
    %c10 = arith.constant 10 : index
    %120 = vector.load %arg12[%c0_101, %c10] : memref<32x26xf32, #tpu.memory_space<vmem>>, vector<32x16xf32>
    %c8_102 = arith.constant 8 : index
    %c0_103 = arith.constant 0 : index
    %c0_104 = arith.constant 0 : index
    %121 = vector.load %arg5[%c8_102, %c0_103, %c0_104] : memref<9x32x16xf32, #tpu.memory_space<vmem>>, vector<1x32x16xf32>
    %122 = vector.shape_cast %121 : vector<1x32x16xf32> to vector<32x16xf32>
    %123 = arith.mulf %122, %120 : vector<32x16xf32>
    %124 = arith.addf %115, %123 : vector<32x16xf32>
    %c8_105 = arith.constant 8 : index
    %c0_106 = arith.constant 0 : index
    %c0_107 = arith.constant 0 : index
    %125 = vector.load %arg7[%c8_105, %c0_106, %c0_107] : memref<9x32x16xf32, #tpu.memory_space<vmem>>, vector<1x32x16xf32>
    %126 = vector.shape_cast %125 : vector<1x32x16xf32> to vector<32x16xf32>
    %127 = arith.mulf %126, %120 : vector<32x16xf32>
    %128 = arith.addf %119, %127 : vector<32x16xf32>
    %c0_108 = arith.constant 0 : index
    %c0_109 = arith.constant 0 : index
    %129 = vector.load %arg6[%c0_108, %c0_109] : memref<32x1xf32, #tpu.memory_space<vmem>>, vector<32x1xf32>
    %130 = vector.broadcast %129 : vector<32x1xf32> to vector<32x16xf32>
    %131 = arith.addf %124, %130 : vector<32x16xf32>
    %c0_110 = arith.constant 0 : index
    %c0_111 = arith.constant 0 : index
    %132 = vector.load %arg8[%c0_110, %c0_111] : memref<32x1xf32, #tpu.memory_space<vmem>>, vector<32x1xf32>
    %133 = vector.broadcast %132 : vector<32x1xf32> to vector<32x16xf32>
    %134 = arith.addf %128, %133 : vector<32x16xf32>
    %c0_112 = arith.constant 0 : index
    %c0_113 = arith.constant 0 : index
    %135 = vector.load %arg4[%c0_112, %c0_113] : memref<16x16xf32, #tpu.memory_space<vmem>>, vector<16x16xf32>
    %cst_114 = arith.constant dense<0.000000e+00> : vector<16x32xf32>
    %136 = tpu.matmul %135, %131, %cst_114 {dimension_numbers = #tpu.dot_dimension_numbers<[1], [1], [0], [0], [0, 0, 1, 0], [], []>} : vector<16x16xf32>, vector<32x16xf32>, vector<16x32xf32> -> vector<16x32xf32>
    %cst_115 = arith.constant dense<0.000000e+00> : vector<16x32xf32>
    %137 = tpu.matmul %135, %134, %cst_115 {dimension_numbers = #tpu.dot_dimension_numbers<[1], [1], [0], [0], [0, 0, 1, 0], [], []>} : vector<16x16xf32>, vector<32x16xf32>, vector<16x32xf32> -> vector<16x32xf32>
    %138 = vector.extract_strided_slice %136 {offsets = [0, 0], sizes = [16, 8], strides = [1, 1]} : vector<16x32xf32> to vector<16x8xf32>
    %c0_116 = arith.constant 0 : index
    %c0_117 = arith.constant 0 : index
    %c0_118 = arith.constant 0 : index
    %c0_119 = arith.constant 0 : index
    %139 = vector.load %arg9[%c0_116, %c0_117, %c0_118, %c0_119] : memref<1x4x16x8xf32, #tpu.memory_space<vmem>>, vector<1x1x16x8xf32>
    %140 = vector.shape_cast %139 : vector<1x1x16x8xf32> to vector<16x8xf32>
    %141 = vector.shape_cast %138 : vector<16x8xf32> to vector<1x1x16x8xf32>
    tpu.vector_store %arg9[%c0_116, %c0_117, %c0_118, %c0_119], %141 {strides = array<i32>} : memref<1x4x16x8xf32, #tpu.memory_space<vmem>>, vector<1x1x16x8xf32>,
    %142 = vector.extract_strided_slice %137 {offsets = [0, 0], sizes = [16, 8], strides = [1, 1]} : vector<16x32xf32> to vector<16x8xf32>
    %c0_120 = arith.constant 0 : index
    %c0_121 = arith.constant 0 : index
    %c0_122 = arith.constant 0 : index
    %c0_123 = arith.constant 0 : index
    %143 = vector.load %arg10[%c0_120, %c0_121, %c0_122, %c0_123] : memref<1x4x16x8xf32, #tpu.memory_space<vmem>>, vector<1x1x16x8xf32>
    %144 = vector.shape_cast %143 : vector<1x1x16x8xf32> to vector<16x8xf32>
    %145 = vector.shape_cast %142 : vector<16x8xf32> to vector<1x1x16x8xf32>
    tpu.vector_store %arg10[%c0_120, %c0_121, %c0_122, %c0_123], %145 {strides = array<i32>} : memref<1x4x16x8xf32, #tpu.memory_space<vmem>>, vector<1x1x16x8xf32>,
    %146 = vector.extract_strided_slice %136 {offsets = [0, 8], sizes = [16, 8], strides = [1, 1]} : vector<16x32xf32> to vector<16x8xf32>
    %c0_124 = arith.constant 0 : index
    %c1_125 = arith.constant 1 : index
    %c0_126 = arith.constant 0 : index
    %c0_127 = arith.constant 0 : index
    %147 = vector.load %arg9[%c0_124, %c1_125, %c0_126, %c0_127] : memref<1x4x16x8xf32, #tpu.memory_space<vmem>>, vector<1x1x16x8xf32>
    %148 = vector.shape_cast %147 : vector<1x1x16x8xf32> to vector<16x8xf32>
    %149 = vector.shape_cast %146 : vector<16x8xf32> to vector<1x1x16x8xf32>
    tpu.vector_store %arg9[%c0_124, %c1_125, %c0_126, %c0_127], %149 {strides = array<i32>} : memref<1x4x16x8xf32, #tpu.memory_space<vmem>>, vector<1x1x16x8xf32>,
    %150 = vector.extract_strided_slice %137 {offsets = [0, 8], sizes = [16, 8], strides = [1, 1]} : vector<16x32xf32> to vector<16x8xf32>
    %c0_128 = arith.constant 0 : index
    %c1_129 = arith.constant 1 : index
    %c0_130 = arith.constant 0 : index
    %c0_131 = arith.constant 0 : index
    %151 = vector.load %arg10[%c0_128, %c1_129, %c0_130, %c0_131] : memref<1x4x16x8xf32, #tpu.memory_space<vmem>>, vector<1x1x16x8xf32>
    %152 = vector.shape_cast %151 : vector<1x1x16x8xf32> to vector<16x8xf32>
    %153 = vector.shape_cast %150 : vector<16x8xf32> to vector<1x1x16x8xf32>
    tpu.vector_store %arg10[%c0_128, %c1_129, %c0_130, %c0_131], %153 {strides = array<i32>} : memref<1x4x16x8xf32, #tpu.memory_space<vmem>>, vector<1x1x16x8xf32>,
    %154 = vector.extract_strided_slice %136 {offsets = [0, 16], sizes = [16, 8], strides = [1, 1]} : vector<16x32xf32> to vector<16x8xf32>
    %c0_132 = arith.constant 0 : index
    %c2_133 = arith.constant 2 : index
    %c0_134 = arith.constant 0 : index
    %c0_135 = arith.constant 0 : index
    %155 = vector.load %arg9[%c0_132, %c2_133, %c0_134, %c0_135] : memref<1x4x16x8xf32, #tpu.memory_space<vmem>>, vector<1x1x16x8xf32>
    %156 = vector.shape_cast %155 : vector<1x1x16x8xf32> to vector<16x8xf32>
    %157 = vector.shape_cast %154 : vector<16x8xf32> to vector<1x1x16x8xf32>
    tpu.vector_store %arg9[%c0_132, %c2_133, %c0_134, %c0_135], %157 {strides = array<i32>} : memref<1x4x16x8xf32, #tpu.memory_space<vmem>>, vector<1x1x16x8xf32>,
    %158 = vector.extract_strided_slice %137 {offsets = [0, 16], sizes = [16, 8], strides = [1, 1]} : vector<16x32xf32> to vector<16x8xf32>
    %c0_136 = arith.constant 0 : index
    %c2_137 = arith.constant 2 : index
    %c0_138 = arith.constant 0 : index
    %c0_139 = arith.constant 0 : index
    %159 = vector.load %arg10[%c0_136, %c2_137, %c0_138, %c0_139] : memref<1x4x16x8xf32, #tpu.memory_space<vmem>>, vector<1x1x16x8xf32>
    %160 = vector.shape_cast %159 : vector<1x1x16x8xf32> to vector<16x8xf32>
    %161 = vector.shape_cast %158 : vector<16x8xf32> to vector<1x1x16x8xf32>
    tpu.vector_store %arg10[%c0_136, %c2_137, %c0_138, %c0_139], %161 {strides = array<i32>} : memref<1x4x16x8xf32, #tpu.memory_space<vmem>>, vector<1x1x16x8xf32>,
    %162 = vector.extract_strided_slice %136 {offsets = [0, 24], sizes = [16, 8], strides = [1, 1]} : vector<16x32xf32> to vector<16x8xf32>
    %c0_140 = arith.constant 0 : index
    %c3_141 = arith.constant 3 : index
    %c0_142 = arith.constant 0 : index
    %c0_143 = arith.constant 0 : index
    %163 = vector.load %arg9[%c0_140, %c3_141, %c0_142, %c0_143] : memref<1x4x16x8xf32, #tpu.memory_space<vmem>>, vector<1x1x16x8xf32>
    %164 = vector.shape_cast %163 : vector<1x1x16x8xf32> to vector<16x8xf32>
    %165 = vector.shape_cast %162 : vector<16x8xf32> to vector<1x1x16x8xf32>
    tpu.vector_store %arg9[%c0_140, %c3_141, %c0_142, %c0_143], %165 {strides = array<i32>} : memref<1x4x16x8xf32, #tpu.memory_space<vmem>>, vector<1x1x16x8xf32>,
    %166 = vector.extract_strided_slice %137 {offsets = [0, 24], sizes = [16, 8], strides = [1, 1]} : vector<16x32xf32> to vector<16x8xf32>
    %c0_144 = arith.constant 0 : index
    %c3_145 = arith.constant 3 : index
    %c0_146 = arith.constant 0 : index
    %c0_147 = arith.constant 0 : index
    %167 = vector.load %arg10[%c0_144, %c3_145, %c0_146, %c0_147] : memref<1x4x16x8xf32, #tpu.memory_space<vmem>>, vector<1x1x16x8xf32>
    %168 = vector.shape_cast %167 : vector<1x1x16x8xf32> to vector<16x8xf32>
    %169 = vector.shape_cast %166 : vector<16x8xf32> to vector<1x1x16x8xf32>
    tpu.vector_store %arg10[%c0_144, %c3_145, %c0_146, %c0_147], %169 {strides = array<i32>} : memref<1x4x16x8xf32, #tpu.memory_space<vmem>>, vector<1x1x16x8xf32>,
    return
  }
  func.func @transform_0(%arg0: i32) -> (i32, i32, i32) {
    %c0_i32 = arith.constant 0 : i32
    %c0_i32_0 = arith.constant 0 : i32
    %c0_i32_1 = arith.constant 0 : i32
    return %arg0, %c0_i32, %c0_i32_0 : i32, i32, i32
  }
  func.func @transform_1(%arg0: i32) -> (i32, i32) {
    %c0_i32 = arith.constant 0 : i32
    %c0_i32_0 = arith.constant 0 : i32
    %c0_i32_1 = arith.constant 0 : i32
    return %c0_i32, %c0_i32_0 : i32, i32
  }
  func.func @transform_2(%arg0: i32) -> (i32, i32, i32) {
    %c0_i32 = arith.constant 0 : i32
    %c0_i32_0 = arith.constant 0 : i32
    %c0_i32_1 = arith.constant 0 : i32
    %c0_i32_2 = arith.constant 0 : i32
    return %c0_i32, %c0_i32_0, %c0_i32_1 : i32, i32, i32
  }
  func.func @transform_3(%arg0: i32) -> (i32, i32) {
    %c0_i32 = arith.constant 0 : i32
    %c0_i32_0 = arith.constant 0 : i32
    %c0_i32_1 = arith.constant 0 : i32
    return %c0_i32, %c0_i32_0 : i32, i32
  }
  func.func @transform_4(%arg0: i32) -> (i32, i32, i32) {
    %c0_i32 = arith.constant 0 : i32
    %c0_i32_0 = arith.constant 0 : i32
    %c0_i32_1 = arith.constant 0 : i32
    %c0_i32_2 = arith.constant 0 : i32
    return %c0_i32, %c0_i32_0, %c0_i32_1 : i32, i32, i32
  }
  func.func @transform_5(%arg0: i32) -> (i32, i32) {
    %c0_i32 = arith.constant 0 : i32
    %c0_i32_0 = arith.constant 0 : i32
    %c0_i32_1 = arith.constant 0 : i32
    return %c0_i32, %c0_i32_0 : i32, i32
  }
  func.func @transform_6(%arg0: i32) -> (i32, i32, i32) {
    %c0_i32 = arith.constant 0 : i32
    %c0_i32_0 = arith.constant 0 : i32
    %c0_i32_1 = arith.constant 0 : i32
    %c0_i32_2 = arith.constant 0 : i32
    return %c0_i32, %c0_i32_0, %c0_i32_1 : i32, i32, i32
  }
  func.func @transform_7(%arg0: i32) -> (i32, i32) {
    %c0_i32 = arith.constant 0 : i32
    %c0_i32_0 = arith.constant 0 : i32
    %c0_i32_1 = arith.constant 0 : i32
    return %c0_i32, %c0_i32_0 : i32, i32
  }
  func.func @transform_8(%arg0: i32) -> (i32, i32, i32, i32) {
    %c0_i32 = arith.constant 0 : i32
    %c0_i32_0 = arith.constant 0 : i32
    %c0_i32_1 = arith.constant 0 : i32
    %c0_i32_2 = arith.constant 0 : i32
    return %arg0, %c0_i32, %c0_i32_0, %c0_i32_1 : i32, i32, i32, i32
  }
  func.func @transform_9(%arg0: i32) -> (i32, i32, i32, i32) {
    %c0_i32 = arith.constant 0 : i32
    %c0_i32_0 = arith.constant 0 : i32
    %c0_i32_1 = arith.constant 0 : i32
    %c0_i32_2 = arith.constant 0 : i32
    return %arg0, %c0_i32, %c0_i32_0, %c0_i32_1 : i32, i32, i32, i32
  }
  func.func @transform_10(%arg0: i32) -> (i32, i32, i32, i32) {
    %c0_i32 = arith.constant 0 : i32
    %c0_i32_0 = arith.constant 0 : i32
    %c0_i32_1 = arith.constant 0 : i32
    %c0_i32_2 = arith.constant 0 : i32
    return %arg0, %c0_i32, %c0_i32_0, %c0_i32_1 : i32, i32, i32, i32
  }
}

</mosaic_0001>

<llo_original>
// kernel: tile.19
$region0: #{tile.19}
  %s0 = inlined_call_operand.vmem [shape: f32[4,8,9], index: 0, kind: input, shape index: {}]
  %s1 = inlined_call_operand.vmem [shape: f32[32,9], index: 1, kind: output, shape index: {}]
  $region1: #{tile.19} parent=0
    #allocation0 [shape = 'u8[36864]{0}', space=vmem, size = 0x9000, scoped, tag = 'scoped mem for input reshape']
    %s3 = ssub.s32 16, 1
    %s4 = scalar_lea.vmem %s0, 32
    %v5 = vld [vmem:[%s4] sm:%s3]
    %s6 = scalar_lea.vmem [#allocation0], 64
    %7 = vst [vmem:[%s6] sm:%s3] %v5
    %s8 = scalar_lea.vmem %s0, 28
    %v9 = vld [vmem:[%s8] sm:%s3]
    %s10 = scalar_lea.vmem [#allocation0], 56
    %11 = vst [vmem:[%s10] sm:%s3] %v9
    %s12 = scalar_lea.vmem %s0, 24
    %v13 = vld [vmem:[%s12] sm:%s3]
    %s14 = scalar_lea.vmem [#allocation0], 48
    %15 = vst [vmem:[%s14] sm:%s3] %v13
    %s16 = scalar_lea.vmem %s0, 20
    %v17 = vld [vmem:[%s16] sm:%s3]
    %s18 = scalar_lea.vmem [#allocation0], 40
    %19 = vst [vmem:[%s18] sm:%s3] %v17
    %s20 = scalar_lea.vmem %s0, 16
    %v21 = vld [vmem:[%s20] sm:%s3]
    %s22 = scalar_lea.vmem [#allocation0], 32
    %23 = vst [vmem:[%s22] sm:%s3] %v21
    %s24 = scalar_lea.vmem %s0, 12
    %v25 = vld [vmem:[%s24] sm:%s3]
    %s26 = scalar_lea.vmem [#allocation0], 24
    %27 = vst [vmem:[%s26] sm:%s3] %v25
    %s28 = scalar_lea.vmem %s0, 8
    %v29 = vld [vmem:[%s28] sm:%s3]
    %s30 = scalar_lea.vmem [#allocation0], 16
    %31 = vst [vmem:[%s30] sm:%s3] %v29
    %s32 = scalar_lea.vmem %s0, 4
    %v33 = vld [vmem:[%s32] sm:%s3]
    %s34 = scalar_lea.vmem [#allocation0], 8
    %35 = vst [vmem:[%s34] sm:%s3] %v33
    %v36 = vld [vmem:[%s0] sm:%s3]
    %37 = vst [vmem:[#allocation0] sm:%s3] %v36
    %v38 = vld [vmem:[#allocation0] ss:$8 sm:$0xf]
    %v39 = vld [vmem:[#allocation0] ss:$8 sm:$0xf0]
    %vm40 = vcmask 1047556
    %v41 = vsel %vm40, %v39, %v38
    %vm42 = vcmask 64512
    %43 = vst.msk [vmem:[%s1] sm:$0xff] %vm42, %v41
    %s44 = scalar_lea.vmem [#allocation0], 64
    %v45 = vld [vmem:[%s44] sm:$0x1]
    %vm46 = vcmask 64512
    %s47 = scalar_lea.vmem %s1, 8
    %48 = vst.msk [vmem:[%s47] sm:$0x1] %vm46, %v45
    %s49 = scalar_lea.vmem [#allocation0], 3
    %v50 = vld [vmem:[%s49] ss:$8 sm:$0xf]
    %s51 = scalar_lea.vmem [#allocation0], 3
    %v52 = vld [vmem:[%s51] ss:$8 sm:$0xf0]
    %vm53 = vcmask 1047556
    %v54 = vsel %vm53, %v52, %v50
    %55 = vrot.lane.b32.xlu0 %v54, 24
    %v56 = vpop.permute.xlu0 %55
    %vm57 = vcmask 261312
    %58 = vst.msk [vmem:[%s1] sm:$0xff] %vm57, %v56
    %s59 = scalar_lea.vmem [#allocation0], 67
    %v60 = vld [vmem:[%s59] sm:$0x1]
    %61 = vrot.lane.b32.xlu0 %v60, 24
    %v62 = vpop.permute.xlu0 %61
    %vm63 = vcmask 261312
    %s64 = scalar_lea.vmem %s1, 8
    %65 = vst.msk [vmem:[%s64] sm:$0x1] %vm63, %v62
    %s66 = scalar_lea.vmem [#allocation0], 2
    %v67 = vld [vmem:[%s66] ss:$8 sm:$0xf]
    %s68 = scalar_lea.vmem [#allocation0], 2
    %v69 = vld [vmem:[%s68] ss:$8 sm:$0xf0]
    %vm70 = vcmask 1047556
    %v71 = vsel %vm70, %v69, %v67
    %72 = vrot.lane.b32.xlu0 %v71, 16
    %v73 = vpop.permute.xlu0 %72
    %vm74 = vcmask 195712
    %75 = vst.msk [vmem:[%s1] sm:$0xff] %vm74, %v73
    %s76 = scalar_lea.vmem [#allocation0], 66
    %v77 = vld [vmem:[%s76] sm:$0x1]
    %78 = vrot.lane.b32.xlu0 %v77, 16
    %v79 = vpop.permute.xlu0 %78
    %vm80 = vcmask 195712
    %s81 = scalar_lea.vmem %s1, 8
    %82 = vst.msk [vmem:[%s81] sm:$0x1] %vm80, %v79
    %s83 = scalar_lea.vmem [#allocation0], 1
    %v84 = vld [vmem:[%s83] ss:$8 sm:$0xf]
    %s85 = scalar_lea.vmem [#allocation0], 1
    %v86 = vld [vmem:[%s85] ss:$8 sm:$0xf0]
    %vm87 = vcmask 1047556
    %v88 = vsel %vm87, %v86, %v84
    %89 = vrot.lane.b32.xlu0 %v88, 8
    %v90 = vpop.permute.xlu0 %89
    %vm91 = vcmask 130112
    %92 = vst.msk [vmem:[%s1] sm:$0xff] %vm91, %v90
    %s93 = scalar_lea.vmem [#allocation0], 65
    %v94 = vld [vmem:[%s93] sm:$0x1]
    %95 = vrot.lane.b32.xlu0 %v94, 8
    %v96 = vpop.permute.xlu0 %95
    %vm97 = vcmask 130112
    %s98 = scalar_lea.vmem %s1, 8
    %99 = vst.msk [vmem:[%s98] sm:$0x1] %vm97, %v96

// kernel: ttt_base_2d_forward.1
$region0: #{ttt_base_2d_forward.1}
  #allocation0 [shape = 'u32[]', space=smem, size = 0x4, offset = 0x4, fixed_abs, tag = 'smem constant byte address 0x4 - core index']
  #allocation1 [shape = 'u32[72,128]{1,0:T(1,128)}', space=vmem, size = 0x9000, scoped, tag = 'internal scratch']
  #allocation2 [shape = 'f32[32,26]{1,0:T(8,128)}', space=vmem, size = 0x4000, scoped, tag = 'scratch operand']
  %s0 = inlined_call_operand.vmem [shape: f32[2,16,32], index: 0, kind: input, shape index: {}]
  %s1 = inlined_call_operand.vmem [shape: f32[32,64], index: 1, kind: input, shape index: {}]
  %s2 = inlined_call_operand.vmem [shape: f32[2,8,16], index: 2, kind: input, shape index: {}]
  %s3 = inlined_call_operand.vmem [shape: f32[16,16], index: 3, kind: input, shape index: {}]
  %s4 = inlined_call_operand.vmem [shape: f32[9,32,16], index: 4, kind: input, shape index: {}]
  %s5 = inlined_call_operand.vmem [shape: f32[32,1], index: 5, kind: input, shape index: {}]
  %s6 = inlined_call_operand.vmem [shape: f32[9,32,16], index: 6, kind: input, shape index: {}]
  %s7 = inlined_call_operand.vmem [shape: f32[32,1], index: 7, kind: input, shape index: {}]
  %s8 = inlined_call_operand.hbm [shape: f32[2,4,16,8], index: 8, kind: output, shape index: {0}]
  %s9 = inlined_call_operand.hbm [shape: f32[2,4,16,8], index: 9, kind: output, shape index: {1}]
  %s10 = inlined_call_operand.hbm [shape: f32[2,4,16,8], index: 10, kind: output, shape index: {2}]
  %11 = xla_tuple %s8, %s9, %s10
  %s12 = sld [smem:[#allocation0]]
  $region81: #{ttt_base_2d_forward.1} parent=0
    _
  %s14 = ssub.s32 1, %s12
  %s15 = scalar_select 0, %s14, %s12
  $region1: #{ttt_base_2d_forward.1} parent=0
    #allocation3 [shape = 'u8[65536]{0}', space=vmem, size = 0x10000, scoped, tag = 'output window, operand 0']
    #allocation4 [shape = 's32[2]{0}', space=sflag, size = 0x8, scoped, tag = 'scoped memory for ttt_base_2d_forward.1']
    #allocation5 [shape = 'u8[65536]{0}', space=vmem, size = 0x10000, scoped, tag = 'output window, operand 1']
    #allocation6 [shape = 's32[2]{0}', space=sflag, size = 0x8, scoped, tag = 'scoped memory for ttt_base_2d_forward.1']
    #allocation7 [shape = 'u8[65536]{0}', space=vmem, size = 0x10000, scoped, tag = 'output window, operand 2']
    %16 = vsyncpa [#allocation4], 0
    %s17 = scalar_lea.sflag [#allocation4], 1
    %18 = vsyncpa %s17, 0
    %19 = vsyncpa [#allocation6], 0
    %s20 = scalar_lea.sflag [#allocation6], 1
    %21 = vsyncpa %s20, 0
    loop: start=0, step=1, limit=4
    $region2: #{ttt_base_2d_forward.1} parent=1 // loop_pre_header
      _
    $region3: #{ttt_base_2d_forward.1} parent=1 // loop_header
      %s23 = sphi 0, %s27
      %p24 = scmp.ge.s32.totalorder %s23, 4
      %s33 = sphi 0, %s35
      %s36 = sphi 0, %s33
      %s37 = sphi 0, %s36
      %s53 = sphi 0, %s37
      %s57 = sphi 0, %s57
      %s59 = sphi 0, %s57
      %s60 = sphi 0, %s59
      %s74 = sphi 0, %s60
      %s78 = sphi 0, %s78
      %s80 = sphi 0, %s78
      %s81 = sphi 0, %s80
      %s95 = sphi 0, %s81
      %s99 = sphi 0, %s99
      %s101 = sphi 0, %s99
      %s102 = sphi 0, %s101
      %s116 = sphi 0, %s102
      %s120 = sphi 0, %s120
      %s122 = sphi 0, %s120
      %s123 = sphi 0, %s122
      %s137 = sphi 0, %s123
      %s141 = sphi 0, %s141
      %s143 = sphi 0, %s141
      %s144 = sphi 0, %s143
      %s158 = sphi 0, %s144
      %s162 = sphi 0, %s162
      %s164 = sphi 0, %s162
      %s165 = sphi 0, %s164
      %s179 = sphi 0, %s165
      %s183 = sphi 0, %s183
      %s185 = sphi 0, %s183
      %s186 = sphi 0, %s185
      %s200 = sphi 0, %s186
      %s206 = sphi 0, %s208
      %s209 = sphi 0, %s206
      %s210 = sphi 0, %s209
      %s226 = sphi 0, %s210
      %s232 = sphi 0, %s234
      %s235 = sphi 0, %s232
      %s236 = sphi 0, %s235
      %s252 = sphi 0, %s236
      %s258 = sphi 0, %s260
      %s261 = sphi 0, %s258
      %s262 = sphi 0, %s261
      %s278 = sphi 0, %s262
    $region4: #{ttt_base_2d_forward.1} parent=1 // loop_header_branch
      %26 = sbr.rel (%p24) target = $region8
    $region5: #{ttt_base_2d_forward.1} parent=1 // loop_body
      %s28 = ssub.s32 %s23, 1
      %s29 = ssub.s32 %s23, 2
      %s30 = sadd.s32 %s23, 1
      %s31 = ssub.s32 %s23, %s30
      %p32 = scmp.eq.s32.totalorder %s31, 0
      %s34 = sadd.s32 %s33, 1
      %s35 = scalar_select %p32, %s33, %s34
      %p38 = pneg %p32
      %p39 = scmp.eq.s32.totalorder %s23, 1
      %p40 = por %p38, %p39
      %p41 = scmp.ne.s32.totalorder %s33, %s36
      %p42 = scmp.eq.s32.totalorder %s23, 0
      %p43 = por %p41, %p42
      %p44 = scmp.ne.s32.totalorder %s33, %s36
      %p45 = scmp.eq.s32.totalorder %s28, 1
      %p46 = por %p44, %p45
      %p47 = scmp.ne.s32.totalorder %s36, %s37
      %p48 = scmp.eq.s32.totalorder %s28, 0
      %p49 = por %p47, %p48
      %p50 = scmp.ne.s32.totalorder %s36, %s37
      %p51 = scmp.eq.s32.totalorder %s29, 1
      %p52 = por %p50, %p51
      %p54 = scmp.ne.s32.totalorder %s37, %s53
      %p55 = scmp.eq.s32.totalorder %s29, 0
      %p56 = por %p54, %p55
      %s58 = sadd.s32 %s57, 1
      %p61 = scmp.eq.s32.totalorder %s23, 1
      %p62 = scmp.ne.s32.totalorder %s57, %s59
      %p63 = scmp.eq.s32.totalorder %s23, 0
      %p64 = por %p62, %p63
      %p65 = scmp.ne.s32.totalorder %s57, %s59
      %p66 = scmp.eq.s32.totalorder %s28, 1
      %p67 = por %p65, %p66
      %p68 = scmp.ne.s32.totalorder %s59, %s60
      %p69 = scmp.eq.s32.totalorder %s28, 0
      %p70 = por %p68, %p69
      %p71 = scmp.ne.s32.totalorder %s59, %s60
      %p72 = scmp.eq.s32.totalorder %s29, 1
      %p73 = por %p71, %p72
      %p75 = scmp.ne.s32.totalorder %s60, %s74
      %p76 = scmp.eq.s32.totalorder %s29, 0
      %p77 = por %p75, %p76
      %s79 = sadd.s32 %s78, 1
      %p82 = scmp.eq.s32.totalorder %s23, 1
      %p83 = scmp.ne.s32.totalorder %s78, %s80
      %p84 = scmp.eq.s32.totalorder %s23, 0
      %p85 = por %p83, %p84
      %p86 = scmp.ne.s32.totalorder %s78, %s80
      %p87 = scmp.eq.s32.totalorder %s28, 1
      %p88 = por %p86, %p87
      %p89 = scmp.ne.s32.totalorder %s80, %s81
      %p90 = scmp.eq.s32.totalorder %s28, 0
      %p91 = por %p89, %p90
      %p92 = scmp.ne.s32.totalorder %s80, %s81
      %p93 = scmp.eq.s32.totalorder %s29, 1
      %p94 = por %p92, %p93
      %p96 = scmp.ne.s32.totalorder %s81, %s95
      %p97 = scmp.eq.s32.totalorder %s29, 0
      %p98 = por %p96, %p97
      %s100 = sadd.s32 %s99, 1
      %p103 = scmp.eq.s32.totalorder %s23, 1
      %p104 = scmp.ne.s32.totalorder %s99, %s101
      %p105 = scmp.eq.s32.totalorder %s23, 0
      %p106 = por %p104, %p105
      %p107 = scmp.ne.s32.totalorder %s99, %s101
      %p108 = scmp.eq.s32.totalorder %s28, 1
      %p109 = por %p107, %p108
      %p110 = scmp.ne.s32.totalorder %s101, %s102
      %p111 = scmp.eq.s32.totalorder %s28, 0
      %p112 = por %p110, %p111
      %p113 = scmp.ne.s32.totalorder %s101, %s102
      %p114 = scmp.eq.s32.totalorder %s29, 1
      %p115 = por %p113, %p114
      %p117 = scmp.ne.s32.totalorder %s102, %s116
      %p118 = scmp.eq.s32.totalorder %s29, 0
      %p119 = por %p117, %p118
      %s121 = sadd.s32 %s120, 1
      %p124 = scmp.eq.s32.totalorder %s23, 1
      %p125 = scmp.ne.s32.totalorder %s120, %s122
      %p126 = scmp.eq.s32.totalorder %s23, 0
      %p127 = por %p125, %p126
      %p128 = scmp.ne.s32.totalorder %s120, %s122
      %p129 = scmp.eq.s32.totalorder %s28, 1
      %p130 = por %p128, %p129
      %p131 = scmp.ne.s32.totalorder %s122, %s123
      %p132 = scmp.eq.s32.totalorder %s28, 0
      %p133 = por %p131, %p132
      %p134 = scmp.ne.s32.totalorder %s122, %s123
      %p135 = scmp.eq.s32.totalorder %s29, 1
      %p136 = por %p134, %p135
      %p138 = scmp.ne.s32.totalorder %s123, %s137
      %p139 = scmp.eq.s32.totalorder %s29, 0
      %p140 = por %p138, %p139
      %s142 = sadd.s32 %s141, 1
      %p145 = scmp.eq.s32.totalorder %s23, 1
      %p146 = scmp.ne.s32.totalorder %s141, %s143
      %p147 = scmp.eq.s32.totalorder %s23, 0
      %p148 = por %p146, %p147
      %p149 = scmp.ne.s32.totalorder %s141, %s143
      %p150 = scmp.eq.s32.totalorder %s28, 1
      %p151 = por %p149, %p150
      %p152 = scmp.ne.s32.totalorder %s143, %s144
      %p153 = scmp.eq.s32.totalorder %s28, 0
      %p154 = por %p152, %p153
      %p155 = scmp.ne.s32.totalorder %s143, %s144
      %p156 = scmp.eq.s32.totalorder %s29, 1
      %p157 = por %p155, %p156
      %p159 = scmp.ne.s32.totalorder %s144, %s158
      %p160 = scmp.eq.s32.totalorder %s29, 0
      %p161 = por %p159, %p160
      %s163 = sadd.s32 %s162, 1
      %p166 = scmp.eq.s32.totalorder %s23, 1
      %p167 = scmp.ne.s32.totalorder %s162, %s164
      %p168 = scmp.eq.s32.totalorder %s23, 0
      %p169 = por %p167, %p168
      %p170 = scmp.ne.s32.totalorder %s162, %s164
      %p171 = scmp.eq.s32.totalorder %s28, 1
      %p172 = por %p170, %p171
      %p173 = scmp.ne.s32.totalorder %s164, %s165
      %p174 = scmp.eq.s32.totalorder %s28, 0
      %p175 = por %p173, %p174
      %p176 = scmp.ne.s32.totalorder %s164, %s165
      %p177 = scmp.eq.s32.totalorder %s29, 1
      %p178 = por %p176, %p177
      %p180 = scmp.ne.s32.totalorder %s165, %s179
      %p181 = scmp.eq.s32.totalorder %s29, 0
      %p182 = por %p180, %p181
      %s184 = sadd.s32 %s183, 1
      %p187 = scmp.eq.s32.totalorder %s23, 1
      %p188 = scmp.ne.s32.totalorder %s183, %s185
      %p189 = scmp.eq.s32.totalorder %s23, 0
      %p190 = por %p188, %p189
      %p191 = scmp.ne.s32.totalorder %s183, %s185
      %p192 = scmp.eq.s32.totalorder %s28, 1
      %p193 = por %p191, %p192
      %p194 = scmp.ne.s32.totalorder %s185, %s186
      %p195 = scmp.eq.s32.totalorder %s28, 0
      %p196 = por %p194, %p195
      %p197 = scmp.ne.s32.totalorder %s185, %s186
      %p198 = scmp.eq.s32.totalorder %s29, 1
      %p199 = por %p197, %p198
      %p201 = scmp.ne.s32.totalorder %s186, %s200
      %p202 = scmp.eq.s32.totalorder %s29, 0
      %p203 = por %p201, %p202
      %s204 = ssub.s32 %s23, %s30
      %p205 = scmp.eq.s32.totalorder %s204, 0
      %s207 = sadd.s32 %s206, 1
      %s208 = scalar_select %p205, %s206, %s207
      %p211 = pneg %p205
      %p212 = scmp.eq.s32.totalorder %s23, 1
      %p213 = por %p211, %p212
      %p214 = scmp.ne.s32.totalorder %s206, %s209
      %p215 = scmp.eq.s32.totalorder %s23, 0
      %p216 = por %p214, %p215
      %p217 = scmp.ne.s32.totalorder %s206, %s209
      %p218 = scmp.eq.s32.totalorder %s28, 1
      %p219 = por %p217, %p218
      %p220 = scmp.ne.s32.totalorder %s209, %s210
      %p221 = scmp.eq.s32.totalorder %s28, 0
      %p222 = por %p220, %p221
      %p223 = scmp.ne.s32.totalorder %s209, %s210
      %p224 = scmp.eq.s32.totalorder %s29, 1
      %p225 = por %p223, %p224
      %p227 = scmp.ne.s32.totalorder %s210, %s226
      %p228 = scmp.eq.s32.totalorder %s29, 0
      %p229 = por %p227, %p228
      %s230 = ssub.s32 %s23, %s30
      %p231 = scmp.eq.s32.totalorder %s230, 0
      %s233 = sadd.s32 %s232, 1
      %s234 = scalar_select %p231, %s232, %s233
      %p237 = pneg %p231
      %p238 = scmp.eq.s32.totalorder %s23, 1
      %p239 = por %p237, %p238
      %p240 = scmp.ne.s32.totalorder %s232, %s235
      %p241 = scmp.eq.s32.totalorder %s23, 0
      %p242 = por %p240, %p241
      %p243 = scmp.ne.s32.totalorder %s232, %s235
      %p244 = scmp.eq.s32.totalorder %s28, 1
      %p245 = por %p243, %p244
      %p246 = scmp.ne.s32.totalorder %s235, %s236
      %p247 = scmp.eq.s32.totalorder %s28, 0
      %p248 = por %p246, %p247
      %p249 = scmp.ne.s32.totalorder %s235, %s236
      %p250 = scmp.eq.s32.totalorder %s29, 1
      %p251 = por %p249, %p250
      %p253 = scmp.ne.s32.totalorder %s236, %s252
      %p254 = scmp.eq.s32.totalorder %s29, 0
      %p255 = por %p253, %p254
      %s256 = ssub.s32 %s23, %s30
      %p257 = scmp.eq.s32.totalorder %s256, 0
      %s259 = sadd.s32 %s258, 1
      %s260 = scalar_select %p257, %s258, %s259
      %p263 = pneg %p257
      %p264 = scmp.eq.s32.totalorder %s23, 1
      %p265 = por %p263, %p264
      %p266 = scmp.ne.s32.totalorder %s258, %s261
      %p267 = scmp.eq.s32.totalorder %s23, 0
      %p268 = por %p266, %p267
      %p269 = scmp.ne.s32.totalorder %s258, %s261
      %p270 = scmp.eq.s32.totalorder %s28, 1
      %p271 = por %p269, %p270
      %p272 = scmp.ne.s32.totalorder %s261, %s262
      %p273 = scmp.eq.s32.totalorder %s28, 0
      %p274 = por %p272, %p273
      %p275 = scmp.ne.s32.totalorder %s261, %s262
      %p276 = scmp.eq.s32.totalorder %s29, 1
      %p277 = por %p275, %p276
      %p279 = scmp.ne.s32.totalorder %s262, %s278
      %p280 = scmp.eq.s32.totalorder %s29, 0
      %p281 = por %p279, %p280
      %p282 = scmp.le.s32.totalorder 1, %s23
      %p283 = scmp.lt.s32.totalorder %s23, 3
      %p284 = pnand %p282, %p283
      %p285 = pneg %p284
      // Predicated region
      $region9: #{ttt_base_2d_forward.1} parent=5 // pred_check
        _
      $region10: #{ttt_base_2d_forward.1} parent=5 // pred_check_branch
        %287 = sbr.rel (%p284) target = $region12
      $region11: #{ttt_base_2d_forward.1} parent=5 // pred_region
        %s288 = ssub.s32 %s23, 1
        // Predicated region
        $region13: #{ttt_base_2d_forward.1} parent=11 // pred_check
          %p289 = pneg %p70
        $region14: #{ttt_base_2d_forward.1} parent=11 // pred_check_branch
          %291 = sbr.rel (%p289) target = $region16
        $region15: #{ttt_base_2d_forward.1} parent=11 // pred_region
          _
        $region16: #{ttt_base_2d_forward.1} parent=11 // pred_fallthru
          _
        // Predicated region
        $region17: #{ttt_base_2d_forward.1} parent=11 // pred_check
          %p292 = pneg %p91
        $region18: #{ttt_base_2d_forward.1} parent=11 // pred_check_branch
          %294 = sbr.rel (%p292) target = $region20
        $region19: #{ttt_base_2d_forward.1} parent=11 // pred_region
          _
        $region20: #{ttt_base_2d_forward.1} parent=11 // pred_fallthru
          _
        // Predicated region
        $region21: #{ttt_base_2d_forward.1} parent=11 // pred_check
          %p295 = pneg %p112
        $region22: #{ttt_base_2d_forward.1} parent=11 // pred_check_branch
          %297 = sbr.rel (%p295) target = $region24
        $region23: #{ttt_base_2d_forward.1} parent=11 // pred_region
          _
        $region24: #{ttt_base_2d_forward.1} parent=11 // pred_fallthru
          _
        // Predicated region
        $region25: #{ttt_base_2d_forward.1} parent=11 // pred_check
          %p298 = pneg %p133
        $region26: #{ttt_base_2d_forward.1} parent=11 // pred_check_branch
          %300 = sbr.rel (%p298) target = $region28
        $region27: #{ttt_base_2d_forward.1} parent=11 // pred_region
          _
        $region28: #{ttt_base_2d_forward.1} parent=11 // pred_fallthru
          _
        // Predicated region
        $region29: #{ttt_base_2d_forward.1} parent=11 // pred_check
          %p301 = pneg %p154
        $region30: #{ttt_base_2d_forward.1} parent=11 // pred_check_branch
          %303 = sbr.rel (%p301) target = $region32
        $region31: #{ttt_base_2d_forward.1} parent=11 // pred_region
          _
        $region32: #{ttt_base_2d_forward.1} parent=11 // pred_fallthru
          _
        // Predicated region
        $region33: #{ttt_base_2d_forward.1} parent=11 // pred_check
          %p304 = pneg %p175
        $region34: #{ttt_base_2d_forward.1} parent=11 // pred_check_branch
          %306 = sbr.rel (%p304) target = $region36
        $region35: #{ttt_base_2d_forward.1} parent=11 // pred_region
          _
        $region36: #{ttt_base_2d_forward.1} parent=11 // pred_fallthru
          _
        // Predicated region
        $region37: #{ttt_base_2d_forward.1} parent=11 // pred_check
          %p307 = pneg %p196
        $region38: #{ttt_base_2d_forward.1} parent=11 // pred_check_branch
          %309 = sbr.rel (%p307) target = $region40
        $region39: #{ttt_base_2d_forward.1} parent=11 // pred_region
          _
        $region40: #{ttt_base_2d_forward.1} parent=11 // pred_fallthru
          _
      $region12: #{ttt_base_2d_forward.1} parent=5 // pred_fallthru
        _
      %p310 = scmp.lt.s32.totalorder %s23, 2
      // Predicated region
      $region41: #{ttt_base_2d_forward.1} parent=5 // pred_check
        %p311 = pneg %p310
      $region42: #{ttt_base_2d_forward.1} parent=5 // pred_check_branch
        %313 = sbr.rel (%p311) target = $region44
      $region43: #{ttt_base_2d_forward.1} parent=5 // pred_region
        // Predicated region
        $region45: #{ttt_base_2d_forward.1} parent=43 // pred_check
          %p314 = pneg %p43
        $region46: #{ttt_base_2d_forward.1} parent=43 // pred_check_branch
          %316 = sbr.rel (%p314) target = $region48
        $region47: #{ttt_base_2d_forward.1} parent=43 // pred_region
          %p317 = scmp.lt.s32.totalorder %s23, 1
          %s318 = scalar_select %p317, %s23, 1
          %s319 = smul.addr %s318, 2
          %s320 = smul.addr %s319, 8
          %s321 = scalar_lea.vmem %s0, %s320
        $region48: #{ttt_base_2d_forward.1} parent=43 // pred_fallthru
          _
      $region44: #{ttt_base_2d_forward.1} parent=5 // pred_fallthru
        _
      %p322 = scmp.le.s32.totalorder 1, %s23
      %p323 = scmp.lt.s32.totalorder %s23, 3
      %p324 = pnand %p322, %p323
      %p325 = pneg %p324
      // Predicated region
      $region49: #{ttt_base_2d_forward.1} parent=5 // pred_check
        _
      $region50: #{ttt_base_2d_forward.1} parent=5 // pred_check_branch
        %327 = sbr.rel (%p324) target = $region52
      $region51: #{ttt_base_2d_forward.1} parent=5 // pred_region
        %s328 = ssub.s32 %s23, 1
        %p329 = scmp.lt.s32.totalorder %s28, 1
        %s330 = scalar_select %p329, %s28, 1
        %s331 = smul.addr %s330, 2
        %s332 = smul.addr %s331, 8
        %s333 = scalar_lea.vmem %s0, %s332
        %p334 = pneg %p49
        %p335 = pneg %p46
        %p336 = pneg %p70
        %p337 = pneg %p67
        %p338 = pneg %p91
        %p339 = pneg %p88
        %p340 = pneg %p112
        %p341 = pneg %p109
        %p342 = pneg %p133
        %p343 = pneg %p130
        %p344 = pneg %p154
        %p345 = pneg %p151
        %p346 = pneg %p175
        %p347 = pneg %p172
        %p348 = pneg %p196
        %p349 = pneg %p193
        %p350 = pneg %p222
        %p351 = pneg %p219
        %s352 = sand.u32 %s209, 1
        %s353 = scalar_lea.sflag [#allocation4], %s352
        %s354 = sand.u32 %s209, 1
        %s355 = smul.addr %s354, 64
        %s356 = scalar_lea.vmem [#allocation3], %s355
        %p357 = pneg %p248
        %p358 = pneg %p245
        %s359 = sand.u32 %s28, 1
        %s360 = scalar_lea.sflag [#allocation6], %s359
        %s361 = sand.u32 %s235, 1
        %s362 = smul.addr %s361, 64
        %s363 = scalar_lea.vmem [#allocation5], %s362
        %p364 = pneg %p274
        %p365 = pneg %p271
        %s366 = sand.u32 %s28, 1
        %s367 = scalar_lea.sflag [#allocation6], %s366
        %s368 = sand.u32 %s261, 1
        %s369 = smul.addr %s368, 64
        %s370 = scalar_lea.vmem [#allocation7], %s369
        %p371 = scmp.lt.s32.totalorder %s28, 1
        %s372 = scalar_select %p371, %s28, 1
        %s373 = smul.addr %s372, 2
        %s374 = smul.addr %s373, 8
        %s375 = scalar_lea.vmem %s0, %s374
        %v376 = vld [vmem:[%s375] sm:$0xff]
        %v377 = vld [vmem:[%s375 + $0x8] sm:$0xff]
        %v378 = vld [vmem:[%s1] sm:$0xff]
        %v379 = vld [vmem:[%s1 + $0x8] sm:$0xff]
        %v380 = vld [vmem:[%s1 + $0x10] sm:$0xff]
        %v381 = vld [vmem:[%s1 + $0x18] sm:$0xff]
        %vm382 = vcmask 261120
        %v384 = vsel %vm382, %v376, 0
        %v387 = vsel %vm382, %v377, 0
        %389 = vmatpush.msra.mxu0 0.0
        %390 = vmatpush.msra.mxu0 0.0
        %391 = vmatpush.msra.mxu0 0.0
        %392 = vmatpush.msra.mxu0 0.0
        %393 = vmatpush.msra.mxu0 0.0
        %394 = vmatpush.msra.mxu0 0.0
        %395 = vmatpush.msra.mxu0 0.0
        %396 = vmatpush.msra.mxu0 0.0
        %397 = vmatpush.msra.mxu0 0.0
        %398 = vmatpush.msra.mxu0 0.0
        %399 = vmatpush.msra.mxu0 0.0
        %400 = vmatpush.msra.mxu0 0.0
        %401 = vmatpush.msra.mxu0 %v381
        %402 = vmatpush.msra.mxu0 %v380
        %403 = vmatpush.msra.mxu0 %v379
        %404 = vmatpush.msra.mxu0 %v378
        %405 = vmatmul.f32.gmra.mxu0 %v384
        %v406 = vpop.f32.mrf.mxu0
        %v407 = vadd.f32 0.0, %v406
        %408 = vmatmul.f32.gmra.mxu0 %v387
        %v409 = vpop.f32.mrf.mxu0
        %v410 = vadd.f32 0.0, %v409
        %411 = vdwg.mxu0
        %414 = vrot.lane.b32.xlu0 %v407, 96
        %v415 = vpop.permute.xlu0 %414
        %416 = vrot.lane.b32.xlu0 %v410, 96
        %v417 = vpop.permute.xlu0 %416
        %vm420 = vcmask 64512
        %421 = vst.msk [vmem:[%s370] sm:$0xff] %vm420, %v415
        %422 = vst.msk [vmem:[%s370 + $0x8] sm:$0xff] %vm420, %v417
        %423 = vrot.lane.b32.xlu0 %v407, 88
        %v424 = vpop.permute.xlu0 %423
        %425 = vrot.lane.b32.xlu0 %v410, 88
        %v426 = vpop.permute.xlu0 %425
        %s429 = scalar_lea.vmem %s370, 16 [#allocation7]
        %430 = vst.msk [vmem:[%s429] sm:$0xff] %vm420, %v424
        %431 = vst.msk [vmem:[%s429 + $0x8] sm:$0xff] %vm420, %v426
        %432 = vrot.lane.b32.xlu0 %v407, 80
        %v433 = vpop.permute.xlu0 %432
        %434 = vrot.lane.b32.xlu0 %v410, 80
        %v435 = vpop.permute.xlu0 %434
        %s438 = scalar_lea.vmem %s370, 32 [#allocation7]
        %439 = vst.msk [vmem:[%s438] sm:$0xff] %vm420, %v433
        %440 = vst.msk [vmem:[%s438 + $0x8] sm:$0xff] %vm420, %v435
        %441 = vrot.lane.b32.xlu0 %v407, 72
        %v442 = vpop.permute.xlu0 %441
        %443 = vrot.lane.b32.xlu0 %v410, 72
        %v444 = vpop.permute.xlu0 %443
        %s447 = scalar_lea.vmem %s370, 48 [#allocation7]
        %448 = vst.msk [vmem:[%s447] sm:$0xff] %vm420, %v442
        %449 = vst.msk [vmem:[%s447 + $0x8] sm:$0xff] %vm420, %v444
        %vm450 = vcmask 211968
        %451 = vst.msk [vmem:[#allocation2] sm:$0xff] %vm450, 0.0
        %452 = vst.msk [vmem:[#allocation2 + $0x8] sm:$0xff] %vm450, 0.0
        %453 = vst.msk [vmem:[#allocation2 + $0x10] sm:$0xff] %vm450, 0.0
        %454 = vst.msk [vmem:[#allocation2 + $0x18] sm:$0xff] %vm450, 0.0
        %v455 = vld [vmem:[%s2] sm:$0xff]
        %vm456 = vcmask 130048
        %v458 = vsel %vm456, %v455, 0
        %460 = vmatpush.msra.mxu0 0.0
        %461 = vmatpush.msra.mxu0 0.0
        %462 = vmatpush.msra.mxu0 0.0
        %463 = vmatpush.msra.mxu0 0.0
        %464 = vmatpush.msra.mxu0 0.0
        %465 = vmatpush.msra.mxu0 0.0
        %466 = vmatpush.msra.mxu0 0.0
        %467 = vmatpush.msra.mxu0 0.0
        %468 = vmatpush.msra.mxu0 0.0
        %469 = vmatpush.msra.mxu0 0.0
        %470 = vmatpush.msra.mxu0 0.0
        %471 = vmatpush.msra.mxu0 0.0
        %472 = vmatpush.msra.mxu0 0.0
        %473 = vmatpush.msra.mxu0 0.0
        %474 = vmatpush.msra.mxu0 %v410
        %475 = vmatpush.msra.mxu0 %v407
        %476 = vmatmul.f32.gmra.mxu0 %v458
        %v477 = vpop.f32.mrf.mxu0
        %v478 = vadd.f32 0.0, %v477
        %479 = vdwg.mxu0
        %481 = vrot.lane.b32.xlu0 %v478, 5
        %v482 = vpop.permute.xlu0 %481
        %vm484 = vcmask 105512
        %485 = vst.msk [vmem:[#allocation2] sm:$0xff] %vm484, %v482
        %486 = vrot.lane.b32.xlu0 %v478, 125
        %v487 = vpop.permute.xlu0 %486
        %489 = vst.msk [vmem:[#allocation2 + $0x8] sm:$0xff] %vm484, %v487
        %490 = vrot.lane.b32.xlu0 %v478, 117
        %v491 = vpop.permute.xlu0 %490
        %493 = vst.msk [vmem:[#allocation2 + $0x10] sm:$0xff] %vm484, %v491
        %494 = vrot.lane.b32.xlu0 %v478, 109
        %v495 = vpop.permute.xlu0 %494
        %497 = vst.msk [vmem:[#allocation2 + $0x18] sm:$0xff] %vm484, %v495
        %s498 = scalar_lea.vmem %s2, 8
        %v499 = vld [vmem:[%s498] sm:$0xff]
        %v501 = vsel %vm456, %v499, 0
        %503 = vmatpush.msra.mxu0 0.0
        %504 = vmatpush.msra.mxu0 0.0
        %505 = vmatpush.msra.mxu0 0.0
        %506 = vmatpush.msra.mxu0 0.0
        %507 = vmatpush.msra.mxu0 0.0
        %508 = vmatpush.msra.mxu0 0.0
        %509 = vmatpush.msra.mxu0 0.0
        %510 = vmatpush.msra.mxu0 0.0
        %511 = vmatpush.msra.mxu0 0.0
        %512 = vmatpush.msra.mxu0 0.0
        %513 = vmatpush.msra.mxu0 0.0
        %514 = vmatpush.msra.mxu0 0.0
        %515 = vmatpush.msra.mxu0 0.0
        %516 = vmatpush.msra.mxu0 0.0
        %517 = vmatpush.msra.mxu0 %v410
        %518 = vmatpush.msra.mxu0 %v407
        %519 = vmatmul.f32.gmra.mxu0 %v501
        %v520 = vpop.f32.mrf.mxu0
        %v521 = vadd.f32 0.0, %v520
        %522 = vdwg.mxu0
        %524 = vrot.lane.b32.xlu0 %v521, 13
        %v525 = vpop.permute.xlu0 %524
        %vm527 = vcmask 171112
        %528 = vst.msk [vmem:[#allocation2] sm:$0xff] %vm527, %v525
        %529 = vrot.lane.b32.xlu0 %v521, 5
        %v530 = vpop.permute.xlu0 %529
        %532 = vst.msk [vmem:[#allocation2 + $0x8] sm:$0xff] %vm527, %v530
        %533 = vrot.lane.b32.xlu0 %v521, 125
        %v534 = vpop.permute.xlu0 %533
        %536 = vst.msk [vmem:[#allocation2 + $0x10] sm:$0xff] %vm527, %v534
        %537 = vrot.lane.b32.xlu0 %v521, 117
        %v538 = vpop.permute.xlu0 %537
        %540 = vst.msk [vmem:[#allocation2 + $0x18] sm:$0xff] %vm527, %v538
        %v541 = vld [vmem:[#allocation2] sm:$0xff]
        %v542 = vld [vmem:[#allocation2 + $0x8] sm:$0xff]
        %v543 = vld [vmem:[#allocation2 + $0x10] sm:$0xff]
        %v544 = vld [vmem:[#allocation2 + $0x18] sm:$0xff]
        %v545 = vld [vmem:[%s4] sm:$0xff]
        %v546 = vld [vmem:[%s4 + $0x8] sm:$0xff]
        %v547 = vld [vmem:[%s4 + $0x10] sm:$0xff]
        %v548 = vld [vmem:[%s4 + $0x18] sm:$0xff]
        %v549 = vmul.f32 %v545, %v541
        %v550 = vmul.f32 %v546, %v542
        %v551 = vmul.f32 %v547, %v543
        %v552 = vmul.f32 %v548, %v544
        %v553 = vadd.f32 %v549, 0.0
        %v554 = vadd.f32 %v550, 0.0
        %v555 = vadd.f32 %v551, 0.0
        %v556 = vadd.f32 %v552, 0.0
        %v557 = vld [vmem:[%s6] sm:$0xff]
        %v558 = vld [vmem:[%s6 + $0x8] sm:$0xff]
        %v559 = vld [vmem:[%s6 + $0x10] sm:$0xff]
        %v560 = vld [vmem:[%s6 + $0x18] sm:$0xff]
        %v561 = vmul.f32 %v557, %v541
        %v562 = vmul.f32 %v558, %v542
        %v563 = vmul.f32 %v559, %v543
        %v564 = vmul.f32 %v560, %v544
        %v565 = vadd.f32 %v561, 0.0
        %v566 = vadd.f32 %v562, 0.0
        %v567 = vadd.f32 %v563, 0.0
        %v568 = vadd.f32 %v564, 0.0
        %s569 = scalar_lea.vmem %s4, 32
        %v570 = vld [vmem:[%s569] sm:$0xff]
        %v571 = vld [vmem:[%s569 + $0x8] sm:$0xff]
        %v572 = vld [vmem:[%s569 + $0x10] sm:$0xff]
        %v573 = vld [vmem:[%s569 + $0x18] sm:$0xff]
        %578 = vrot.lane.b32.xlu0 %v541, 127
        %v579 = vpop.permute.xlu0 %578
        %580 = vrot.lane.b32.xlu0 %v542, 127
        %v581 = vpop.permute.xlu0 %580
        %582 = vrot.lane.b32.xlu0 %v543, 127
        %v583 = vpop.permute.xlu0 %582
        %584 = vrot.lane.b32.xlu0 %v544, 127
        %v585 = vpop.permute.xlu0 %584
        %v590 = vmul.f32 %v570, %v579
        %v591 = vmul.f32 %v571, %v581
        %v592 = vmul.f32 %v572, %v583
        %v593 = vmul.f32 %v573, %v585
        %v594 = vadd.f32 %v553, %v590
        %v595 = vadd.f32 %v554, %v591
        %v596 = vadd.f32 %v555, %v592
        %v597 = vadd.f32 %v556, %v593
        %s598 = scalar_lea.vmem %s6, 32
        %v599 = vld [vmem:[%s598] sm:$0xff]
        %v600 = vld [vmem:[%s598 + $0x8] sm:$0xff]
        %v601 = vld [vmem:[%s598 + $0x10] sm:$0xff]
        %v602 = vld [vmem:[%s598 + $0x18] sm:$0xff]
        %v603 = vmul.f32 %v599, %v579
        %v604 = vmul.f32 %v600, %v581
        %v605 = vmul.f32 %v601, %v583
        %v606 = vmul.f32 %v602, %v585
        %v607 = vadd.f32 %v565, %v603
        %v608 = vadd.f32 %v566, %v604
        %v609 = vadd.f32 %v567, %v605
        %v610 = vadd.f32 %v568, %v606
        %s611 = scalar_lea.vmem %s4, 64
        %v612 = vld [vmem:[%s611] sm:$0xff]
        %v613 = vld [vmem:[%s611 + $0x8] sm:$0xff]
        %v614 = vld [vmem:[%s611 + $0x10] sm:$0xff]
        %v615 = vld [vmem:[%s611 + $0x18] sm:$0xff]
        %616 = vrot.lane.b32.xlu0 %v541, 126
        %v617 = vpop.permute.xlu0 %616
        %618 = vrot.lane.b32.xlu0 %v542, 126
        %v619 = vpop.permute.xlu0 %618
        %620 = vrot.lane.b32.xlu0 %v543, 126
        %v621 = vpop.permute.xlu0 %620
        %622 = vrot.lane.b32.xlu0 %v544, 126
        %v623 = vpop.permute.xlu0 %622
        %v628 = vmul.f32 %v612, %v617
        %v629 = vmul.f32 %v613, %v619
        %v630 = vmul.f32 %v614, %v621
        %v631 = vmul.f32 %v615, %v623
        %v632 = vadd.f32 %v594, %v628
        %v633 = vadd.f32 %v595, %v629
        %v634 = vadd.f32 %v596, %v630
        %v635 = vadd.f32 %v597, %v631
        %s636 = scalar_lea.vmem %s6, 64
        %v637 = vld [vmem:[%s636] sm:$0xff]
        %v638 = vld [vmem:[%s636 + $0x8] sm:$0xff]
        %v639 = vld [vmem:[%s636 + $0x10] sm:$0xff]
        %v640 = vld [vmem:[%s636 + $0x18] sm:$0xff]
        %v641 = vmul.f32 %v637, %v617
        %v642 = vmul.f32 %v638, %v619
        %v643 = vmul.f32 %v639, %v621
        %v644 = vmul.f32 %v640, %v623
        %v645 = vadd.f32 %v607, %v641
        %v646 = vadd.f32 %v608, %v642
        %v647 = vadd.f32 %v609, %v643
        %v648 = vadd.f32 %v610, %v644
        %s649 = scalar_lea.vmem %s4, 96
        %v650 = vld [vmem:[%s649] sm:$0xff]
        %v651 = vld [vmem:[%s649 + $0x8] sm:$0xff]
        %v652 = vld [vmem:[%s649 + $0x10] sm:$0xff]
        %v653 = vld [vmem:[%s649 + $0x18] sm:$0xff]
        %654 = vrot.lane.b32.xlu0 %v541, 124
        %v655 = vpop.permute.xlu0 %654
        %656 = vrot.lane.b32.xlu0 %v542, 124
        %v657 = vpop.permute.xlu0 %656
        %658 = vrot.lane.b32.xlu0 %v543, 124
        %v659 = vpop.permute.xlu0 %658
        %660 = vrot.lane.b32.xlu0 %v544, 124
        %v661 = vpop.permute.xlu0 %660
        %v666 = vmul.f32 %v650, %v655
        %v667 = vmul.f32 %v651, %v657
        %v668 = vmul.f32 %v652, %v659
        %v669 = vmul.f32 %v653, %v661
        %v670 = vadd.f32 %v632, %v666
        %v671 = vadd.f32 %v633, %v667
        %v672 = vadd.f32 %v634, %v668
        %v673 = vadd.f32 %v635, %v669
        %s674 = scalar_lea.vmem %s6, 96
        %v675 = vld [vmem:[%s674] sm:$0xff]
        %v676 = vld [vmem:[%s674 + $0x8] sm:$0xff]
        %v677 = vld [vmem:[%s674 + $0x10] sm:$0xff]
        %v678 = vld [vmem:[%s674 + $0x18] sm:$0xff]
        %v679 = vmul.f32 %v675, %v655
        %v680 = vmul.f32 %v676, %v657
        %v681 = vmul.f32 %v677, %v659
        %v682 = vmul.f32 %v678, %v661
        %v683 = vadd.f32 %v645, %v679
        %v684 = vadd.f32 %v646, %v680
        %v685 = vadd.f32 %v647, %v681
        %v686 = vadd.f32 %v648, %v682
        %s687 = scalar_lea.vmem %s4, 128
        %v688 = vld [vmem:[%s687] sm:$0xff]
        %v689 = vld [vmem:[%s687 + $0x8] sm:$0xff]
        %v690 = vld [vmem:[%s687 + $0x10] sm:$0xff]
        %v691 = vld [vmem:[%s687 + $0x18] sm:$0xff]
        %692 = vrot.lane.b32.xlu0 %v541, 123
        %v693 = vpop.permute.xlu0 %692
        %694 = vrot.lane.b32.xlu0 %v542, 123
        %v695 = vpop.permute.xlu0 %694
        %696 = vrot.lane.b32.xlu0 %v543, 123
        %v697 = vpop.permute.xlu0 %696
        %698 = vrot.lane.b32.xlu0 %v544, 123
        %v699 = vpop.permute.xlu0 %698
        %v704 = vmul.f32 %v688, %v693
        %v705 = vmul.f32 %v689, %v695
        %v706 = vmul.f32 %v690, %v697
        %v707 = vmul.f32 %v691, %v699
        %v708 = vadd.f32 %v670, %v704
        %v709 = vadd.f32 %v671, %v705
        %v710 = vadd.f32 %v672, %v706
        %v711 = vadd.f32 %v673, %v707
        %s712 = scalar_lea.vmem %s6, 128
        %v713 = vld [vmem:[%s712] sm:$0xff]
        %v714 = vld [vmem:[%s712 + $0x8] sm:$0xff]
        %v715 = vld [vmem:[%s712 + $0x10] sm:$0xff]
        %v716 = vld [vmem:[%s712 + $0x18] sm:$0xff]
        %v717 = vmul.f32 %v713, %v693
        %v718 = vmul.f32 %v714, %v695
        %v719 = vmul.f32 %v715, %v697
        %v720 = vmul.f32 %v716, %v699
        %v721 = vadd.f32 %v683, %v717
        %v722 = vadd.f32 %v684, %v718
        %v723 = vadd.f32 %v685, %v719
        %v724 = vadd.f32 %v686, %v720
        %s725 = scalar_lea.vmem %s4, 160
        %v726 = vld [vmem:[%s725] sm:$0xff]
        %v727 = vld [vmem:[%s725 + $0x8] sm:$0xff]
        %v728 = vld [vmem:[%s725 + $0x10] sm:$0xff]
        %v729 = vld [vmem:[%s725 + $0x18] sm:$0xff]
        %730 = vrot.lane.b32.xlu0 %v541, 122
        %v731 = vpop.permute.xlu0 %730
        %732 = vrot.lane.b32.xlu0 %v542, 122
        %v733 = vpop.permute.xlu0 %732
        %734 = vrot.lane.b32.xlu0 %v543, 122
        %v735 = vpop.permute.xlu0 %734
        %736 = vrot.lane.b32.xlu0 %v544, 122
        %v737 = vpop.permute.xlu0 %736
        %v742 = vmul.f32 %v726, %v731
        %v743 = vmul.f32 %v727, %v733
        %v744 = vmul.f32 %v728, %v735
        %v745 = vmul.f32 %v729, %v737
        %v746 = vadd.f32 %v708, %v742
        %v747 = vadd.f32 %v709, %v743
        %v748 = vadd.f32 %v710, %v744
        %v749 = vadd.f32 %v711, %v745
        %s750 = scalar_lea.vmem %s6, 160
        %v751 = vld [vmem:[%s750] sm:$0xff]
        %v752 = vld [vmem:[%s750 + $0x8] sm:$0xff]
        %v753 = vld [vmem:[%s750 + $0x10] sm:$0xff]
        %v754 = vld [vmem:[%s750 + $0x18] sm:$0xff]
        %v755 = vmul.f32 %v751, %v731
        %v756 = vmul.f32 %v752, %v733
        %v757 = vmul.f32 %v753, %v735
        %v758 = vmul.f32 %v754, %v737
        %v759 = vadd.f32 %v721, %v755
        %v760 = vadd.f32 %v722, %v756
        %v761 = vadd.f32 %v723, %v757
        %v762 = vadd.f32 %v724, %v758
        %s763 = scalar_lea.vmem %s4, 192
        %v764 = vld [vmem:[%s763] sm:$0xff]
        %v765 = vld [vmem:[%s763 + $0x8] sm:$0xff]
        %v766 = vld [vmem:[%s763 + $0x10] sm:$0xff]
        %v767 = vld [vmem:[%s763 + $0x18] sm:$0xff]
        %768 = vrot.lane.b32.xlu0 %v541, 120
        %v769 = vpop.permute.xlu0 %768
        %770 = vrot.lane.b32.xlu0 %v542, 120
        %v771 = vpop.permute.xlu0 %770
        %772 = vrot.lane.b32.xlu0 %v543, 120
        %v773 = vpop.permute.xlu0 %772
        %774 = vrot.lane.b32.xlu0 %v544, 120
        %v775 = vpop.permute.xlu0 %774
        %v780 = vmul.f32 %v764, %v769
        %v781 = vmul.f32 %v765, %v771
        %v782 = vmul.f32 %v766, %v773
        %v783 = vmul.f32 %v767, %v775
        %v784 = vadd.f32 %v746, %v780
        %v785 = vadd.f32 %v747, %v781
        %v786 = vadd.f32 %v748, %v782
        %v787 = vadd.f32 %v749, %v783
        %s788 = scalar_lea.vmem %s6, 192
        %v789 = vld [vmem:[%s788] sm:$0xff]
        %v790 = vld [vmem:[%s788 + $0x8] sm:$0xff]
        %v791 = vld [vmem:[%s788 + $0x10] sm:$0xff]
        %v792 = vld [vmem:[%s788 + $0x18] sm:$0xff]
        %v793 = vmul.f32 %v789, %v769
        %v794 = vmul.f32 %v790, %v771
        %v795 = vmul.f32 %v791, %v773
        %v796 = vmul.f32 %v792, %v775
        %v797 = vadd.f32 %v759, %v793
        %v798 = vadd.f32 %v760, %v794
        %v799 = vadd.f32 %v761, %v795
        %v800 = vadd.f32 %v762, %v796
        %s801 = scalar_lea.vmem %s4, 224
        %v802 = vld [vmem:[%s801] sm:$0xff]
        %v803 = vld [vmem:[%s801 + $0x8] sm:$0xff]
        %v804 = vld [vmem:[%s801 + $0x10] sm:$0xff]
        %v805 = vld [vmem:[%s801 + $0x18] sm:$0xff]
        %806 = vrot.lane.b32.xlu0 %v541, 119
        %v807 = vpop.permute.xlu0 %806
        %808 = vrot.lane.b32.xlu0 %v542, 119
        %v809 = vpop.permute.xlu0 %808
        %810 = vrot.lane.b32.xlu0 %v543, 119
        %v811 = vpop.permute.xlu0 %810
        %812 = vrot.lane.b32.xlu0 %v544, 119
        %v813 = vpop.permute.xlu0 %812
        %v818 = vmul.f32 %v802, %v807
        %v819 = vmul.f32 %v803, %v809
        %v820 = vmul.f32 %v804, %v811
        %v821 = vmul.f32 %v805, %v813
        %v822 = vadd.f32 %v784, %v818
        %v823 = vadd.f32 %v785, %v819
        %v824 = vadd.f32 %v786, %v820
        %v825 = vadd.f32 %v787, %v821
        %s826 = scalar_lea.vmem %s6, 224
        %v827 = vld [vmem:[%s826] sm:$0xff]
        %v828 = vld [vmem:[%s826 + $0x8] sm:$0xff]
        %v829 = vld [vmem:[%s826 + $0x10] sm:$0xff]
        %v830 = vld [vmem:[%s826 + $0x18] sm:$0xff]
        %v831 = vmul.f32 %v827, %v807
        %v832 = vmul.f32 %v828, %v809
        %v833 = vmul.f32 %v829, %v811
        %v834 = vmul.f32 %v830, %v813
        %v835 = vadd.f32 %v797, %v831
        %v836 = vadd.f32 %v798, %v832
        %v837 = vadd.f32 %v799, %v833
        %v838 = vadd.f32 %v800, %v834
        %s839 = scalar_lea.vmem %s4, 256
        %v840 = vld [vmem:[%s839] sm:$0xff]
        %v841 = vld [vmem:[%s839 + $0x8] sm:$0xff]
        %v842 = vld [vmem:[%s839 + $0x10] sm:$0xff]
        %v843 = vld [vmem:[%s839 + $0x18] sm:$0xff]
        %844 = vrot.lane.b32.xlu0 %v541, 118
        %v845 = vpop.permute.xlu0 %844
        %846 = vrot.lane.b32.xlu0 %v542, 118
        %v847 = vpop.permute.xlu0 %846
        %848 = vrot.lane.b32.xlu0 %v543, 118
        %v849 = vpop.permute.xlu0 %848
        %850 = vrot.lane.b32.xlu0 %v544, 118
        %v851 = vpop.permute.xlu0 %850
        %v856 = vmul.f32 %v840, %v845
        %v857 = vmul.f32 %v841, %v847
        %v858 = vmul.f32 %v842, %v849
        %v859 = vmul.f32 %v843, %v851
        %v860 = vadd.f32 %v822, %v856
        %v861 = vadd.f32 %v823, %v857
        %v862 = vadd.f32 %v824, %v858
        %v863 = vadd.f32 %v825, %v859
        %s864 = scalar_lea.vmem %s6, 256
        %v865 = vld [vmem:[%s864] sm:$0xff]
        %v866 = vld [vmem:[%s864 + $0x8] sm:$0xff]
        %v867 = vld [vmem:[%s864 + $0x10] sm:$0xff]
        %v868 = vld [vmem:[%s864 + $0x18] sm:$0xff]
        %v869 = vmul.f32 %v865, %v845
        %v870 = vmul.f32 %v866, %v847
        %v871 = vmul.f32 %v867, %v849
        %v872 = vmul.f32 %v868, %v851
        %v873 = vadd.f32 %v835, %v869
        %v874 = vadd.f32 %v836, %v870
        %v875 = vadd.f32 %v837, %v871
        %v876 = vadd.f32 %v838, %v872
        %v877 = vld [vmem:[%s5] sm:$0xff]
        %v878 = vld [vmem:[%s5 + $0x8] sm:$0xff]
        %v879 = vld [vmem:[%s5 + $0x10] sm:$0xff]
        %v880 = vld [vmem:[%s5 + $0x18] sm:$0xff]
        %882 = vset.pattern.permute.xlu0 0
        %883 = vperm.xlu0 %882, %v877
        %v884 = vpop.permute.xlu0 %883
        %887 = vset.pattern.permute.xlu0 0
        %888 = vperm.xlu0 %887, %v878
        %v889 = vpop.permute.xlu0 %888
        %892 = vset.pattern.permute.xlu0 0
        %893 = vperm.xlu0 %892, %v879
        %v894 = vpop.permute.xlu0 %893
        %897 = vset.pattern.permute.xlu0 0
        %898 = vperm.xlu0 %897, %v880
        %v899 = vpop.permute.xlu0 %898
        %v901 = vadd.f32 %v860, %v884
        %v902 = vadd.f32 %v861, %v889
        %v903 = vadd.f32 %v862, %v894
        %v904 = vadd.f32 %v863, %v899
        %v905 = vld [vmem:[%s7] sm:$0xff]
        %v906 = vld [vmem:[%s7 + $0x8] sm:$0xff]
        %v907 = vld [vmem:[%s7 + $0x10] sm:$0xff]
        %v908 = vld [vmem:[%s7 + $0x18] sm:$0xff]
        %910 = vset.pattern.permute.xlu0 0
        %911 = vperm.xlu0 %910, %v905
        %v912 = vpop.permute.xlu0 %911
        %915 = vset.pattern.permute.xlu0 0
        %916 = vperm.xlu0 %915, %v906
        %v917 = vpop.permute.xlu0 %916
        %920 = vset.pattern.permute.xlu0 0
        %921 = vperm.xlu0 %920, %v907
        %v922 = vpop.permute.xlu0 %921
        %925 = vset.pattern.permute.xlu0 0
        %926 = vperm.xlu0 %925, %v908
        %v927 = vpop.permute.xlu0 %926
        %v929 = vadd.f32 %v873, %v912
        %v930 = vadd.f32 %v874, %v917
        %v931 = vadd.f32 %v875, %v922
        %v932 = vadd.f32 %v876, %v927
        %v933 = vld [vmem:[%s3] sm:$0xff]
        %v934 = vld [vmem:[%s3 + $0x8] sm:$0xff]
        %v936 = vsel %vm456, %v933, 0
        %v939 = vsel %vm456, %v934, 0
        %v942 = vsel %vm456, %v901, 0
        %v945 = vsel %vm456, %v902, 0
        %v948 = vsel %vm456, %v903, 0
        %v951 = vsel %vm456, %v904, 0
        %953 = vmatpush.xpose.msra.mxu0 0.0
        %954 = vmatpush.xpose.msra.mxu0 0.0
        %955 = vmatpush.xpose.msra.mxu0 0.0
        %956 = vmatpush.xpose.msra.mxu0 0.0
        %957 = vmatpush.xpose.msra.mxu0 0.0
        %958 = vmatpush.xpose.msra.mxu0 0.0
        %959 = vmatpush.xpose.msra.mxu0 0.0
        %960 = vmatpush.xpose.msra.mxu0 0.0
        %961 = vmatpush.xpose.msra.mxu0 0.0
        %962 = vmatpush.xpose.msra.mxu0 0.0
        %963 = vmatpush.xpose.msra.mxu0 0.0
        %964 = vmatpush.xpose.msra.mxu0 0.0
        %965 = vmatpush.xpose.msra.mxu0 %v951
        %966 = vmatpush.xpose.msra.mxu0 %v948
        %967 = vmatpush.xpose.msra.mxu0 %v945
        %968 = vmatpush.xpose.msra.mxu0 %v942
        %969 = vmatmul.f32.gmra.mxu0 %v936
        %v970 = vpop.f32.mrf.mxu0
        %v971 = vadd.f32 0.0, %v970
        %972 = vmatmul.f32.gmra.mxu0 %v939
        %v973 = vpop.f32.mrf.mxu0
        %v974 = vadd.f32 0.0, %v973
        %975 = vdwg.mxu0
        %v977 = vsel %vm456, %v929, 0
        %v980 = vsel %vm456, %v930, 0
        %v983 = vsel %vm456, %v931, 0
        %v986 = vsel %vm456, %v932, 0
        %988 = vmatpush.xpose.msra.mxu0 0.0
        %989 = vmatpush.xpose.msra.mxu0 0.0
        %990 = vmatpush.xpose.msra.mxu0 0.0
        %991 = vmatpush.xpose.msra.mxu0 0.0
        %992 = vmatpush.xpose.msra.mxu0 0.0
        %993 = vmatpush.xpose.msra.mxu0 0.0
        %994 = vmatpush.xpose.msra.mxu0 0.0
        %995 = vmatpush.xpose.msra.mxu0 0.0
        %996 = vmatpush.xpose.msra.mxu0 0.0
        %997 = vmatpush.xpose.msra.mxu0 0.0
        %998 = vmatpush.xpose.msra.mxu0 0.0
        %999 = vmatpush.xpose.msra.mxu0 0.0
        %1000 = vmatpush.xpose.msra.mxu0 %v986
        %1001 = vmatpush.xpose.msra.mxu0 %v983
        %1002 = vmatpush.xpose.msra.mxu0 %v980
        %1003 = vmatpush.xpose.msra.mxu0 %v977
        %1004 = vmatmul.f32.gmra.mxu0 %v936
        %v1005 = vpop.f32.mrf.mxu0
        %v1006 = vadd.f32 0.0, %v1005
        %1007 = vmatmul.f32.gmra.mxu0 %v939
        %v1008 = vpop.f32.mrf.mxu0
        %v1009 = vadd.f32 0.0, %v1008
        %1010 = vdwg.mxu0
        %1011 = vst.msk [vmem:[%s356] sm:$0xff] %vm420, %v971
        %1012 = vst.msk [vmem:[%s356 + $0x8] sm:$0xff] %vm420, %v974
        %1013 = vst.msk [vmem:[%s363] sm:$0xff] %vm420, %v1006
        %1014 = vst.msk [vmem:[%s363 + $0x8] sm:$0xff] %vm420, %v1009
        %1017 = vrot.lane.b32.xlu0 %v971, 120
        %v1018 = vpop.permute.xlu0 %1017
        %1019 = vrot.lane.b32.xlu0 %v974, 120
        %v1020 = vpop.permute.xlu0 %1019
        %s1023 = scalar_lea.vmem %s356, 16 [#allocation3]
        %1024 = vst.msk [vmem:[%s1023] sm:$0xff] %vm420, %v1018
        %1025 = vst.msk [vmem:[%s1023 + $0x8] sm:$0xff] %vm420, %v1020
        %1028 = vrot.lane.b32.xlu0 %v1006, 120
        %v1029 = vpop.permute.xlu0 %1028
        %1030 = vrot.lane.b32.xlu0 %v1009, 120
        %v1031 = vpop.permute.xlu0 %1030
        %s1034 = scalar_lea.vmem %s363, 16 [#allocation5]
        %1035 = vst.msk [vmem:[%s1034] sm:$0xff] %vm420, %v1029
        %1036 = vst.msk [vmem:[%s1034 + $0x8] sm:$0xff] %vm420, %v1031
        %1037 = vrot.lane.b32.xlu0 %v971, 112
        %v1038 = vpop.permute.xlu0 %1037
        %1039 = vrot.lane.b32.xlu0 %v974, 112
        %v1040 = vpop.permute.xlu0 %1039
        %s1043 = scalar_lea.vmem %s356, 32 [#allocation3]
        %1044 = vst.msk [vmem:[%s1043] sm:$0xff] %vm420, %v1038
        %1045 = vst.msk [vmem:[%s1043 + $0x8] sm:$0xff] %vm420, %v1040
        %1046 = vrot.lane.b32.xlu0 %v1006, 112
        %v1047 = vpop.permute.xlu0 %1046
        %1048 = vrot.lane.b32.xlu0 %v1009, 112
        %v1049 = vpop.permute.xlu0 %1048
        %s1052 = scalar_lea.vmem %s363, 32 [#allocation5]
        %1053 = vst.msk [vmem:[%s1052] sm:$0xff] %vm420, %v1047
        %1054 = vst.msk [vmem:[%s1052 + $0x8] sm:$0xff] %vm420, %v1049
        %1055 = vrot.lane.b32.xlu0 %v971, 104
        %v1056 = vpop.permute.xlu0 %1055
        %1057 = vrot.lane.b32.xlu0 %v974, 104
        %v1058 = vpop.permute.xlu0 %1057
        %s1061 = scalar_lea.vmem %s356, 48 [#allocation3]
        %1062 = vst.msk [vmem:[%s1061] sm:$0xff] %vm420, %v1056
        %1063 = vst.msk [vmem:[%s1061 + $0x8] sm:$0xff] %vm420, %v1058
        %1064 = vrot.lane.b32.xlu0 %v1006, 104
        %v1065 = vpop.permute.xlu0 %1064
        %1066 = vrot.lane.b32.xlu0 %v1009, 104
        %v1067 = vpop.permute.xlu0 %1066
        %s1070 = scalar_lea.vmem %s363, 48 [#allocation5]
        %1071 = vst.msk [vmem:[%s1070] sm:$0xff] %vm420, %v1065
        %1072 = vst.msk [vmem:[%s1070 + $0x8] sm:$0xff] %vm420, %v1067
        %s1073 = sand.u32 %s209, 1
        %s1074 = scalar_lea.sflag [#allocation4], %s1073
        %s1075 = sand.u32 %s209, 1
        %s1076 = smul.addr %s1075, 64
        %s1077 = scalar_lea.vmem [#allocation3], %s1076
        %s1078 = sand.u32 %s28, 1
        %s1079 = scalar_lea.sflag [#allocation6], %s1078
        %s1080 = sand.u32 %s235, 1
        %s1081 = smul.addr %s1080, 64
        %s1082 = scalar_lea.vmem [#allocation5], %s1081
        %s1083 = sand.u32 %s28, 1
        %s1084 = scalar_lea.sflag [#allocation6], %s1083
        %s1085 = sand.u32 %s261, 1
        %s1086 = smul.addr %s1085, 64
        %s1087 = scalar_lea.vmem [#allocation7], %s1086
        // Predicated region
        $region53: #{ttt_base_2d_forward.1} parent=51 // pred_check
          %p1088 = pneg %p219
        $region54: #{ttt_base_2d_forward.1} parent=51 // pred_check_branch
          %1090 = sbr.rel (%p1088) target = $region56
        $region55: #{ttt_base_2d_forward.1} parent=51 // pred_region
          %1092 = vsyncadd %s1074, 0
          %s1093 = smul.addr %s28, 8
          %s1094 = smul.addr %s1093, 8
          %s1095 = scalar_lea.hbm %s8, %s1094
          %s1096 = sshll.u32 %s1077, 4
          %s1097 = int_to_ptr.vmem [resolvable:$true] %s1096
          %s1098 = sshll.u32 %s1095, 4
          %s1099 = int_to_ptr.hbm [resolvable:$true] %s1098
          %1104 = dma.vmem_to_hbm [thread:$0]  %s1097, 1024, %s1099, %s1074, 128, 128, 8
        $region56: #{ttt_base_2d_forward.1} parent=51 // pred_fallthru
          _
        // Predicated region
        $region57: #{ttt_base_2d_forward.1} parent=51 // pred_check
          %p1105 = pneg %p245
        $region58: #{ttt_base_2d_forward.1} parent=51 // pred_check_branch
          %1107 = sbr.rel (%p1105) target = $region60
        $region59: #{ttt_base_2d_forward.1} parent=51 // pred_region
          %1109 = vsyncadd %s1079, 0
          %s1110 = smul.addr %s28, 8
          %s1111 = smul.addr %s1110, 8
          %s1112 = scalar_lea.hbm %s9, %s1111
          %s1113 = sshll.u32 %s1082, 4
          %s1114 = int_to_ptr.vmem [resolvable:$true] %s1113
          %s1115 = sshll.u32 %s1112, 4
          %s1116 = int_to_ptr.hbm [resolvable:$true] %s1115
          %1121 = dma.vmem_to_hbm [thread:$0]  %s1114, 1024, %s1116, %s1079, 128, 128, 8
        $region60: #{ttt_base_2d_forward.1} parent=51 // pred_fallthru
          _
        // Predicated region
        $region61: #{ttt_base_2d_forward.1} parent=51 // pred_check
          %p1122 = pneg %p271
        $region62: #{ttt_base_2d_forward.1} parent=51 // pred_check_branch
          %1124 = sbr.rel (%p1122) target = $region64
        $region63: #{ttt_base_2d_forward.1} parent=51 // pred_region
          %1126 = vsyncadd %s1084, 0
          %s1127 = smul.addr %s28, 8
          %s1128 = smul.addr %s1127, 8
          %s1129 = scalar_lea.hbm %s10, %s1128
          %s1130 = sshll.u32 %s1087, 4
          %s1131 = int_to_ptr.vmem [resolvable:$true] %s1130
          %s1132 = sshll.u32 %s1129, 4
          %s1133 = int_to_ptr.hbm [resolvable:$true] %s1132
          %1138 = dma.vmem_to_hbm [thread:$0]  %s1131, 1024, %s1133, %s1084, 128, 128, 8
        $region64: #{ttt_base_2d_forward.1} parent=51 // pred_fallthru
          _
      $region52: #{ttt_base_2d_forward.1} parent=5 // pred_fallthru
        _
      %p1139 = scmp.le.s32.totalorder 2, %s23
      // Predicated region
      $region65: #{ttt_base_2d_forward.1} parent=5 // pred_check
        %p1140 = pneg %p1139
      $region66: #{ttt_base_2d_forward.1} parent=5 // pred_check_branch
        %1142 = sbr.rel (%p1140) target = $region68
      $region67: #{ttt_base_2d_forward.1} parent=5 // pred_region
        %s1143 = ssub.s32 %s23, 2
        // Predicated region
        $region69: #{ttt_base_2d_forward.1} parent=67 // pred_check
          %p1144 = pneg %p225
        $region70: #{ttt_base_2d_forward.1} parent=67 // pred_check_branch
          %1146 = sbr.rel (%p1144) target = $region72
        $region71: #{ttt_base_2d_forward.1} parent=67 // pred_region
          %s1147 = sand.u32 %s210, 1
          %s1148 = scalar_lea.sflag [#allocation4], %s1147
          %s1149 = sand.u32 %s210, 1
          %s1150 = smul.addr %s1149, 64
          %s1151 = scalar_lea.vmem [#allocation3], %s1150
          %1153 = dma.done %s1148, 1024
        $region72: #{ttt_base_2d_forward.1} parent=67 // pred_fallthru
          _
        // Predicated region
        $region73: #{ttt_base_2d_forward.1} parent=67 // pred_check
          %p1154 = pneg %p251
        $region74: #{ttt_base_2d_forward.1} parent=67 // pred_check_branch
          %1156 = sbr.rel (%p1154) target = $region76
        $region75: #{ttt_base_2d_forward.1} parent=67 // pred_region
          %s1157 = sand.u32 %s29, 1
          %s1158 = scalar_lea.sflag [#allocation6], %s1157
          %s1159 = sand.u32 %s236, 1
          %s1160 = smul.addr %s1159, 64
          %s1161 = scalar_lea.vmem [#allocation5], %s1160
          %1163 = dma.done %s1158, 1024
        $region76: #{ttt_base_2d_forward.1} parent=67 // pred_fallthru
          _
        // Predicated region
        $region77: #{ttt_base_2d_forward.1} parent=67 // pred_check
          %p1164 = pneg %p277
        $region78: #{ttt_base_2d_forward.1} parent=67 // pred_check_branch
          %1166 = sbr.rel (%p1164) target = $region80
        $region79: #{ttt_base_2d_forward.1} parent=67 // pred_region
          %s1167 = sand.u32 %s29, 1
          %s1168 = scalar_lea.sflag [#allocation6], %s1167
          %s1169 = sand.u32 %s262, 1
          %s1170 = smul.addr %s1169, 64
          %s1171 = scalar_lea.vmem [#allocation7], %s1170
          %1173 = dma.done %s1168, 1024
        $region80: #{ttt_base_2d_forward.1} parent=67 // pred_fallthru
          _
      $region68: #{ttt_base_2d_forward.1} parent=5 // pred_fallthru
        _
    $region6: #{ttt_base_2d_forward.1} parent=1 // loop_footer
      %s27 = sadd.s32 1, %s23
    $region7: #{ttt_base_2d_forward.1} parent=1 // loop_footer_branch
      %22 = sbr.rel target = $region3
    $region8: #{ttt_base_2d_forward.1} parent=1 // loop_exit
      _
    %1174 = vsyncpa [#allocation4], 1
    %s1175 = scalar_lea.sflag [#allocation4], 1
    %1176 = vsyncpa %s1175, 1
    %1177 = vsyncpa [#allocation6], 1
    %s1178 = scalar_lea.sflag [#allocation6], 1
    %1179 = vsyncpa %s1178, 1

</llo_original>
